<compile_context>
chip_gen: v5e
topology: v5e:2x2
jax: 0.10.0
libtpu: 0.0.40
codegen_flags: <defaults>
</compile_context>

<pallas_src>
import functools

import jax
import jax.numpy as jnp
from jax import lax
from jax.experimental import pallas as pl
from jax.experimental.pallas import tpu as pltpu


def _attention_tail(L, W, pad, em3, waT_ref, ba_ref, w2T_ref, b2_ref, out_ref):
    """Shared tail: attention conv + sigmoid gate + 1x1 conv + tanh + max-pool.

    em3: (bt, L, E) embeddings in the compute dtype.
    """
    bt, _, E = em3.shape
    C = w2T_ref.shape[1]
    M = bt * L
    em2 = em3.reshape(M, E)                               # one big MXU matmul

    # --- attention Conv2d(1,1,(W,E)): one (M,E)x(E,W) matmul gives all W taps.
    s3 = jnp.dot(em2, waT_ref[...],
                 preferred_element_type=jnp.float32).reshape(bt, L, W)

    # Zero-pad the sequence axis (the module's explicit zero padding) on the
    # small (bt, L, W) tap tensor, then combine the diagonals.
    # TODO(synk): replace this concatenate+slice tap combine with pltpu.roll
    # along the sublane axis + an iota edge mask (reviewer suggestion, modest
    # win); kept the proven formulation here, its footprint is counted in the
    # wrapper's VMEM budget.
    if pad > 0:
        z = jnp.zeros((bt, pad, W), jnp.float32)
        s3p = jnp.concatenate([z, s3, z], axis=1)          # (bt, L + W - 1, W)
    else:
        s3p = s3
    acc = jnp.zeros((bt, L, 1), jnp.float32)
    for j in range(W):                                     # W is small & static
        acc = acc + s3p[:, j:j + L, j:j + 1]
    scores = jax.nn.sigmoid(acc + ba_ref[0])               # (bt, L, 1) f32

    # --- gate the embeddings.  Round the tiny scores to the compute dtype
    # instead of upcasting the big block (no (bt,L,E) f32 temporary).  In the
    # bf16 path this rounds `weighted` to bf16 before the second matmul.
    weighted = em3 * scores.astype(em3.dtype)              # (bt, L, E)

    # --- Conv2d(1, C, (1, E)) as one matmul, + bias, tanh.
    h = jnp.dot(weighted.reshape(M, E), w2T_ref[...],
                preferred_element_type=jnp.float32)        # (M, C) f32
    h = jnp.tanh(h.reshape(bt, L, C) + b2_ref[...])        # + (1, C) broadcast

    # --- MaxPool2d((L, 1)) == max over the sequence axis; 2-D output slab.
    out_ref[...] = jnp.max(h, axis=1)                      # (bt, C)


def _fused_gather_kernel(L, W, pad, Vp, ids_ref, tab_ref, waT_ref, ba_ref,
                         w2T_ref, b2_ref, out_ref):
    """Streams int32 ids and gathers the VMEM-resident table in-kernel."""
    bt = ids_ref.shape[0]
    E = tab_ref.shape[1]
    ids = ids_ref[...]                                               # (bt, L, 1)
    viota = lax.broadcasted_iota(jnp.int32, (bt, L, Vp), 2)
    onehot = (ids == viota).astype(tab_ref.dtype)                    # (bt, L, Vp)
    # One-hot gather as an MXU matmul (exact: rows are 0/1); MXU is idle anyway.
    em3 = jnp.dot(onehot.reshape(bt * L, Vp), tab_ref[...],
                  preferred_element_type=tab_ref.dtype).reshape(bt, L, E)
    _attention_tail(L, W, pad, em3, waT_ref, ba_ref, w2T_ref, b2_ref, out_ref)


def _streamed_embed_kernel(L, W, pad, emb_ref, waT_ref, ba_ref, w2T_ref,
                           b2_ref, out_ref):
    """Fallback for large vocabularies: streams pre-gathered (bt, L, E) blocks."""
    _attention_tail(L, W, pad, emb_ref[...], waT_ref, ba_ref, w2T_ref, b2_ref,
                    out_ref)


def local_attention_forward(x, emb_table, att_w, att_b, cnn_w, cnn_b, *,
                            win_size, compute_dtype=jnp.float32,
                            block_batch=None):
    """x: (B, L) int32 token ids.  Returns (B, C, 1, 1) float32 (NCHW)."""
    B, L = x.shape
    V, E = emb_table.shape
    C = cnn_w.shape[0]
    W = win_size
    if W % 2 != 1:
        # Even win_size is also broken in the PyTorch module (scores length L-1
        # cannot broadcast against embed length L); only odd windows supported.
        raise ValueError("win_size must be odd")
    pad = (W - 1) // 2

    cd = jnp.dtype(compute_dtype)
    it = cd.itemsize
    lane = 128
    f32 = 4

    def ru(v, m):
        return ((v + m - 1) // m) * m

    Ep, Wp, Cp = ru(E, lane), ru(W, lane), ru(C, lane)
    Vp = ru(V, lane)

    # In-kernel gather only while the one-hot block stays cheap.
    # TODO(synk): for large vocabularies, gather via per-row DMA from the
    # HBM-resident table (or an in-kernel jnp.take) instead of the XLA fallback.
    fuse_gather = Vp <= 512

    # ---- per-batch-row VMEM estimate, padded to (8,128) tiles, conservatively
    # assuming the big intermediates are simultaneously live (review: account
    # for lane padding, f32 temporaries and double buffering; v7x has 64 MiB).
    per_row = 0
    if fuse_gather:
        per_row += 2 * L * lane * 4            # (bt, L, 1) int32 id block, x2 bufs
        per_row += L * Vp * it                 # one-hot
    else:
        per_row += 2 * L * Ep * it             # streamed (bt, L, E) block, x2 bufs
    per_row += L * Ep * it                     # gathered / loaded embeddings
    per_row += L * Wp * f32                    # attention taps s3 (f32)
    per_row += (L + 2 * pad) * Wp * f32        # zero-padded taps (f32)
    per_row += L * lane * f32                  # scores (lane-padded (bt, L, 1))
    per_row += L * Ep * it                     # gated embeddings
    per_row += 2 * L * Cp * f32                # h before/after tanh (f32)
    per_row += 2 * Cp * f32                    # (bt, C) output block, x2 bufs

    resident = 2 * (ru(E, 8) * Wp + ru(E, 8) * Cp + 8 * Cp) * f32   # small weights
    if fuse_gather:
        resident += 2 * Vp * Ep * it           # VMEM-resident embedding table

    block_budget = (32 << 20) - resident       # MiB-scale blocks, v7x-safe
    if block_batch is None:
        bt = max(1, block_budget // per_row)
    else:
        bt = int(block_batch)
    if B >= 16:
        # Keep >= 2 grid steps so both v7x TensorCores get work, and keep the
        # batch block dim a multiple of the 8-sublane tile.
        bt = min(bt, ru(pl.cdiv(B, 2), 8))
        bt = max(8, (bt // 8) * 8)
    else:
        bt = B                                 # one full-extent block (legal & tiny)
    Bp = pl.cdiv(B, bt) * bt

    vmem_limit = int(min(max(32 << 20, resident + per_row * bt + (8 << 20)),
                         48 << 20))            # <= 48 MiB: safe on v7x's 64 MiB

    # ---- operand prep (weights pre-transposed so the kernel sees plain (K,N)).
    waT = att_w.reshape(W, E).T.astype(cd)                 # (E, W)
    ba = att_b.reshape(1).astype(jnp.float32)              # scalar -> SMEM
    w2T = cnn_w.reshape(C, E).T.astype(cd)                 # (E, C)
    b2 = cnn_b.reshape(1, C).astype(jnp.float32)

    if fuse_gather:
        tab = jnp.zeros((Vp, E), cd).at[:V].set(emb_table.astype(cd))
        ids = x.astype(jnp.int32).reshape(B, L, 1)         # (B, L, 1) id stream
        if Bp != B:
            ids = jnp.pad(ids, ((0, Bp - B), (0, 0), (0, 0)))
        stream_args = (ids, tab)
        stream_specs = [
            pl.BlockSpec((bt, L, 1), lambda b: (b, 0, 0)),      # streamed ids
            pl.BlockSpec((Vp, E), lambda b: (0, 0)),            # resident table
        ]
        kernel = functools.partial(_fused_gather_kernel, L, W, pad, Vp)
    else:
        embed = jnp.take(emb_table, x, axis=0).astype(cd)   # (B, L, E) via XLA
        if Bp != B:
            embed = jnp.pad(embed, ((0, Bp - B), (0, 0), (0, 0)))
        stream_args = (embed,)
        stream_specs = [pl.BlockSpec((bt, L, E), lambda b: (b, 0, 0))]
        kernel = functools.partial(_streamed_embed_kernel, L, W, pad)

    out = pl.pallas_call(
        kernel,
        out_shape=jax.ShapeDtypeStruct((Bp, C), jnp.float32),
        grid_spec=pltpu.PrefetchScalarGridSpec(
            num_scalar_prefetch=0,
            grid=(Bp // bt,),
            in_specs=stream_specs + [
                pl.BlockSpec((E, W), lambda b: (0, 0)),          # att weights
                pl.BlockSpec(memory_space=pltpu.MemorySpace.SMEM),  # att bias
                pl.BlockSpec((E, C), lambda b: (0, 0)),          # cnn weights
                pl.BlockSpec((1, C), lambda b: (0, 0)),          # cnn bias
            ],
            out_specs=pl.BlockSpec((bt, C), lambda b: (b, 0)),
        ),
        compiler_params=pltpu.CompilerParams(
            dimension_semantics=("parallel",),
            vmem_limit_bytes=vmem_limit),
    )(*stream_args, waT, ba, w2T, b2)

    return out[:B].reshape(B, C, 1, 1)


def _reference_forward(x, emb_table, att_w, att_b, cnn_w, cnn_b, *, win_size):
    """Pure-JAX reference mirroring the PyTorch module (f32)."""
    pad = (win_size - 1) // 2
    embed = jnp.take(emb_table, x, axis=0)                    # (B, L, E)
    B, L, E = embed.shape
    C = cnn_w.shape[0]
    xpad = jnp.pad(embed, ((0, 0), (pad, pad), (0, 0)))
    wa = att_w.reshape(win_size, E)
    scores = jnp.zeros((B, L), jnp.float32)
    for j in range(win_size):
        scores = scores + jnp.einsum('ble,e->bl', xpad[:, j:j + L, :], wa[j])
    scores = jax.nn.sigmoid(scores + att_b[0])[..., None]     # (B, L, 1)
    weighted = embed * scores
    h = jnp.tanh(jnp.einsum('ble,ce->blc', weighted, cnn_w.reshape(C, E)) + cnn_b)
    return jnp.max(h, axis=1).reshape(B, C, 1, 1)


if __name__ == "__main__":
    E, W, C = 32, 3, 8       # embed_size, win_size, out_channels

    key = jax.random.PRNGKey(0)
    k_x, k_emb, k_wa, k_ba, k_w2, k_b2, k_x2, k_emb2 = jax.random.split(key, 8)

    att_w = jax.random.normal(k_wa, (1, 1, W, E), jnp.float32) * 0.1   # Conv2d(1,1,(W,E)).weight
    att_b = jax.random.normal(k_ba, (1,), jnp.float32) * 0.1           # Conv2d(1,1,(W,E)).bias
    cnn_w = jax.random.normal(k_w2, (C, 1, 1, E), jnp.float32) * 0.1   # Conv2d(1,C,(1,E)).weight
    cnn_b = jax.random.normal(k_b2, (C,), jnp.float32) * 0.1           # Conv2d(1,C,(1,E)).bias

    # Config 1: small vocab -> fused in-kernel gather.  B=18 exercises the
    # multi-step grid (2 parallel steps), batch padding and 8-aligned blocks.
    B1, L1, vocab1 = 18, 16, 100
    x1 = jax.random.randint(k_x, (B1, L1), 0, vocab1 + 1, dtype=jnp.int32)
    emb1 = jax.random.normal(k_emb, (vocab1 + 1, E), jnp.float32)
    ref1 = _reference_forward(x1, emb1, att_w, att_b, cnn_w, cnn_b, win_size=W)

    out1 = local_attention_forward(x1, emb1, att_w, att_b, cnn_w, cnn_b,
                                   win_size=W)
    jax.block_until_ready(out1)
    assert out1.shape == (B1, C, 1, 1), out1.shape
    assert jnp.allclose(out1, ref1, atol=2e-4, rtol=2e-4), \
        float(jnp.max(jnp.abs(out1 - ref1)))

    # bf16 matmul-operand path (recommended on v6e/v7x; also fine on v5e): the
    # table, gates and matmul operands are bf16, accumulation / sigmoid / tanh /
    # max stay f32, so only operand rounding differs from the f32 reference.
    out1_bf16 = local_attention_forward(x1, emb1, att_w, att_b, cnn_w, cnn_b,
                                        win_size=W,
                                        compute_dtype=jnp.bfloat16)
    jax.block_until_ready(out1_bf16)
    assert out1_bf16.shape == (B1, C, 1, 1), out1_bf16.shape
    assert jnp.allclose(out1_bf16, ref1, atol=5e-2, rtol=5e-2), \
        float(jnp.max(jnp.abs(out1_bf16 - ref1)))

    # Config 2: larger vocab -> streamed-embedding fallback path (tiny batch,
    # single full-extent block).
    B2, L2, vocab2 = 2, 16, 600
    x2 = jax.random.randint(k_x2, (B2, L2), 0, vocab2 + 1, dtype=jnp.int32)
    emb2 = jax.random.normal(k_emb2, (vocab2 + 1, E), jnp.float32)
    ref2 = _reference_forward(x2, emb2, att_w, att_b, cnn_w, cnn_b, win_size=W)
    out2 = local_attention_forward(x2, emb2, att_w, att_b, cnn_w, cnn_b,
                                   win_size=W)
    jax.block_until_ready(out2)
    assert out2.shape == (B2, C, 1, 1), out2.shape
    assert jnp.allclose(out2, ref2, atol=2e-4, rtol=2e-4), \
        float(jnp.max(jnp.abs(out2 - ref2)))

    print("KERNEL_OK")
</pallas_src>

<mosaic_0001>
module attributes {stable_mosaic.version = 11 : i64} {
  func.func @_fused_gather_kernel(%arg0: i32, %arg1: memref<16x16x1xi32, #tpu.memory_space<vmem>>, %arg2: memref<128x32xf32, #tpu.memory_space<vmem>>, %arg3: memref<32x3xf32, #tpu.memory_space<vmem>>, %arg4: memref<1xf32, #tpu.memory_space<smem>>, %arg5: memref<32x8xf32, #tpu.memory_space<vmem>>, %arg6: memref<1x8xf32, #tpu.memory_space<vmem>>, %arg7: memref<16x8xf32, #tpu.memory_space<vmem>>) attributes {dimension_semantics = [#tpu.dimension_semantics<parallel>], iteration_bounds = array<i64: 2>, scalar_prefetch = 0 : i64, scratch_operands = 0 : i64, tpu.core_type = #tpu.core_type<tc>, window_params = [{transform_indices = @transform_0, window_bounds = array<i64: 16, 16, 1>}, {pipeline_mode = #tpu.pipeline_mode<synchronous>, transform_indices = @transform_1, window_bounds = array<i64: 128, 32>}, {pipeline_mode = #tpu.pipeline_mode<synchronous>, transform_indices = @transform_2, window_bounds = array<i64: 32, 3>}, {transform_indices = @transform_3, window_bounds = array<i64: 1>}, {pipeline_mode = #tpu.pipeline_mode<synchronous>, transform_indices = @transform_4, window_bounds = array<i64: 32, 8>}, {pipeline_mode = #tpu.pipeline_mode<synchronous>, transform_indices = @transform_5, window_bounds = array<i64: 1, 8>}, {transform_indices = @transform_6, window_bounds = array<i64: 16, 8>}]} {
    %c0 = arith.constant 0 : index
    %c0_0 = arith.constant 0 : index
    %c0_1 = arith.constant 0 : index
    %0 = vector.load %arg1[%c0, %c0_0, %c0_1] : memref<16x16x1xi32, #tpu.memory_space<vmem>>, vector<16x16x1xi32>
    %1 = tpu.iota {dimensions = array<i32: 2>} : vector<16x16x128xi32>
    %2 = vector.broadcast %0 : vector<16x16x1xi32> to vector<16x16x128xi32>
    %3 = arith.cmpi eq, %2, %1 : vector<16x16x128xi32>
    %4 = arith.extui %3 : vector<16x16x128xi1> to vector<16x16x128xi32>
    %5 = arith.sitofp %4 : vector<16x16x128xi32> to vector<16x16x128xf32>
    %6 = vector.shape_cast %5 : vector<16x16x128xf32> to vector<256x128xf32>
    %c0_2 = arith.constant 0 : index
    %c0_3 = arith.constant 0 : index
    %7 = vector.load %arg2[%c0_2, %c0_3] : memref<128x32xf32, #tpu.memory_space<vmem>>, vector<128x32xf32>
    %cst = arith.constant dense<0.000000e+00> : vector<256x32xf32>
    %8 = tpu.matmul %6, %7, %cst {dimension_numbers = #tpu.dot_dimension_numbers<[1], [0], [0], [1], [0, 0, 1, 1], [], []>} : vector<256x128xf32>, vector<128x32xf32>, vector<256x32xf32> -> vector<256x32xf32>
    %9 = vector.shape_cast %8 : vector<256x32xf32> to vector<16x16x32xf32>
    %10 = vector.shape_cast %9 : vector<16x16x32xf32> to vector<256x32xf32>
    %c0_4 = arith.constant 0 : index
    %c0_5 = arith.constant 0 : index
    %11 = vector.load %arg3[%c0_4, %c0_5] : memref<32x3xf32, #tpu.memory_space<vmem>>, vector<32x3xf32>
    %cst_6 = arith.constant dense<0.000000e+00> : vector<256x3xf32>
    %12 = tpu.matmul %10, %11, %cst_6 {dimension_numbers = #tpu.dot_dimension_numbers<[1], [0], [0], [1], [0, 0, 1, 1], [], []>} : vector<256x32xf32>, vector<32x3xf32>, vector<256x3xf32> -> vector<256x3xf32>
    %13 = vector.shape_cast %12 : vector<256x3xf32> to vector<16x16x3xf32>
    %cst_7 = arith.constant 0.000000e+00 : f32
    %14 = vector.broadcast %cst_7 : f32 to vector<16x1x3xf32>
    %15 = tpu.concatenate %14, %13, %14 in 1 : vector<16x1x3xf32>, vector<16x16x3xf32>, vector<16x1x3xf32> -> vector<16x18x3xf32>
    %cst_8 = arith.constant 0.000000e+00 : f32
    %16 = vector.broadcast %cst_8 : f32 to vector<16x16x1xf32>
    %17 = vector.extract_strided_slice %15 {offsets = [0, 0, 0], sizes = [16, 16, 1], strides = [1, 1, 1]} : vector<16x18x3xf32> to vector<16x16x1xf32>
    %18 = arith.addf %16, %17 : vector<16x16x1xf32>
    %19 = vector.extract_strided_slice %15 {offsets = [0, 1, 1], sizes = [16, 16, 1], strides = [1, 1, 1]} : vector<16x18x3xf32> to vector<16x16x1xf32>
    %20 = arith.addf %18, %19 : vector<16x16x1xf32>
    %21 = vector.extract_strided_slice %15 {offsets = [0, 2, 2], sizes = [16, 16, 1], strides = [1, 1, 1]} : vector<16x18x3xf32> to vector<16x16x1xf32>
    %22 = arith.addf %20, %21 : vector<16x16x1xf32>
    %c0_9 = arith.constant 0 : index
    %23 = memref.load %arg4[%c0_9] : memref<1xf32, #tpu.memory_space<smem>>
    %24 = vector.broadcast %23 : f32 to vector<16x16x1xf32>
    %25 = arith.addf %22, %24 : vector<16x16x1xf32>
    %26 = arith.negf %25 : vector<16x16x1xf32>
    %27 = math.exp %26 : vector<16x16x1xf32>
    %cst_10 = arith.constant 1.000000e+00 : f32
    %28 = vector.broadcast %cst_10 : f32 to vector<16x16x1xf32>
    %29 = arith.addf %28, %27 : vector<16x16x1xf32>
    %30 = arith.divf %28, %29 : vector<16x16x1xf32>
    %31 = vector.broadcast %30 : vector<16x16x1xf32> to vector<16x16x32xf32>
    %32 = arith.mulf %9, %31 : vector<16x16x32xf32>
    %33 = vector.shape_cast %32 : vector<16x16x32xf32> to vector<256x32xf32>
    %c0_11 = arith.constant 0 : index
    %c0_12 = arith.constant 0 : index
    %34 = vector.load %arg5[%c0_11, %c0_12] : memref<32x8xf32, #tpu.memory_space<vmem>>, vector<32x8xf32>
    %cst_13 = arith.constant dense<0.000000e+00> : vector<256x8xf32>
    %35 = tpu.matmul %33, %34, %cst_13 {dimension_numbers = #tpu.dot_dimension_numbers<[1], [0], [0], [1], [0, 0, 1, 1], [], []>} : vector<256x32xf32>, vector<32x8xf32>, vector<256x8xf32> -> vector<256x8xf32>
    %36 = vector.shape_cast %35 : vector<256x8xf32> to vector<16x16x8xf32>
    %c0_14 = arith.constant 0 : index
    %c0_15 = arith.constant 0 : index
    %37 = vector.load %arg6[%c0_14, %c0_15] : memref<1x8xf32, #tpu.memory_space<vmem>>, vector<1x8xf32>
    %38 = vector.shape_cast %37 : vector<1x8xf32> to vector<1x1x8xf32>
    %39 = vector.broadcast %38 : vector<1x1x8xf32> to vector<16x16x8xf32>
    %40 = arith.addf %36, %39 : vector<16x16x8xf32>
    %41 = math.tanh %40 : vector<16x16x8xf32>
    %cst_16 = arith.constant dense<0xFF800000> : vector<16x8xf32>
    %42 = vector.multi_reduction <maximumf>, %41, %cst_16 [1] : vector<16x16x8xf32> to vector<16x8xf32>
    %c0_17 = arith.constant 0 : index
    %c0_18 = arith.constant 0 : index
    %43 = vector.load %arg7[%c0_17, %c0_18] : memref<16x8xf32, #tpu.memory_space<vmem>>, vector<16x8xf32>
    tpu.vector_store %arg7[%c0_17, %c0_18], %42 {strides = array<i32>} : memref<16x8xf32, #tpu.memory_space<vmem>>, vector<16x8xf32>,
    return
  }
  func.func @transform_0(%arg0: i32) -> (i32, i32, i32) {
    %c0_i32 = arith.constant 0 : i32
    %c0_i32_0 = arith.constant 0 : i32
    %c0_i32_1 = arith.constant 0 : i32
    return %arg0, %c0_i32, %c0_i32_0 : i32, i32, i32
  }
  func.func @transform_1(%arg0: i32) -> (i32, i32) {
    %c0_i32 = arith.constant 0 : i32
    %c0_i32_0 = arith.constant 0 : i32
    %c0_i32_1 = arith.constant 0 : i32
    return %c0_i32, %c0_i32_0 : i32, i32
  }
  func.func @transform_2(%arg0: i32) -> (i32, i32) {
    %c0_i32 = arith.constant 0 : i32
    %c0_i32_0 = arith.constant 0 : i32
    %c0_i32_1 = arith.constant 0 : i32
    return %c0_i32, %c0_i32_0 : i32, i32
  }
  func.func @transform_3(%arg0: i32) -> i32 {
    %c0_i32 = arith.constant 0 : i32
    %c0_i32_0 = arith.constant 0 : i32
    return %c0_i32 : i32
  }
  func.func @transform_4(%arg0: i32) -> (i32, i32) {
    %c0_i32 = arith.constant 0 : i32
    %c0_i32_0 = arith.constant 0 : i32
    %c0_i32_1 = arith.constant 0 : i32
    return %c0_i32, %c0_i32_0 : i32, i32
  }
  func.func @transform_5(%arg0: i32) -> (i32, i32) {
    %c0_i32 = arith.constant 0 : i32
    %c0_i32_0 = arith.constant 0 : i32
    %c0_i32_1 = arith.constant 0 : i32
    return %c0_i32, %c0_i32_0 : i32, i32
  }
  func.func @transform_6(%arg0: i32) -> (i32, i32) {
    %c0_i32 = arith.constant 0 : i32
    %c0_i32_0 = arith.constant 0 : i32
    return %arg0, %c0_i32 : i32, i32
  }
}

</mosaic_0001>

<llo_original>
// kernel: tpu_custom_call.1
$region0: #{tpu_custom_call.1}
  #allocation0 [shape = 'u32[]', space=smem, size = 0x4, offset = 0x4, fixed_abs, tag = 'smem constant byte address 0x4 - core index']
  #allocation1 [shape = 'u32[72,128]{1,0:T(1,128)}', space=vmem, size = 0x9000, scoped, tag = 'internal scratch']
  #allocation2 [shape = 'f32[1]{0:T(128)S(6)}', space=smem, size = 0x200, scoped, tag = 'scoped memory for tpu_custom_call.1']
  %s0 = inlined_call_operand.vmem [shape: s32[32,16,1], index: 0, kind: input, shape index: {}]
  %s1 = inlined_call_operand.vmem [shape: f32[128,32], index: 1, kind: input, shape index: {}]
  %s2 = inlined_call_operand.vmem [shape: f32[32,3], index: 2, kind: input, shape index: {}]
  %s3 = inlined_call_operand.<no memory space> [shape: f32[1], index: 3, kind: input, shape index: {}]
  %s4 = inlined_call_operand.vmem [shape: f32[32,8], index: 4, kind: input, shape index: {}]
  %s5 = inlined_call_operand.vmem [shape: f32[1,8], index: 5, kind: input, shape index: {}]
  %s6 = inlined_call_operand.vmem [shape: f32[32,8], index: 6, kind: output, shape index: {}]
  %s7 = sld [smem:[#allocation0]]
  $region57: #{tpu_custom_call.1} parent=0
    _
  %s9 = ssub.s32 1, %s7
  %s10 = scalar_select 0, %s9, %s7
  %11 = sst [smem:[#allocation2]] %s3
  loop: start=0, step=1, limit=4
  $region2: #{tpu_custom_call.1} parent=0 // loop_pre_header
    _
  $region3: #{tpu_custom_call.1} parent=0 // loop_header
    %s13 = sphi 0, %s17
    %p14 = scmp.ge.s32.totalorder %s13, 4
    %s23 = sphi 0, %s25
    %s26 = sphi 0, %s23
    %s27 = sphi 0, %s26
    %s43 = sphi 0, %s27
    %s47 = sphi 0, %s47
    %s49 = sphi 0, %s47
    %s50 = sphi 0, %s49
    %s64 = sphi 0, %s50
    %s68 = sphi 0, %s68
    %s70 = sphi 0, %s68
    %s71 = sphi 0, %s70
    %s85 = sphi 0, %s71
    %s89 = sphi 0, %s89
    %s91 = sphi 0, %s89
    %s92 = sphi 0, %s91
    %s106 = sphi 0, %s92
    %s110 = sphi 0, %s110
    %s112 = sphi 0, %s110
    %s113 = sphi 0, %s112
    %s127 = sphi 0, %s113
    %s131 = sphi 0, %s131
    %s133 = sphi 0, %s131
    %s134 = sphi 0, %s133
    %s148 = sphi 0, %s134
    %s154 = sphi 0, %s156
    %s157 = sphi 0, %s154
    %s158 = sphi 0, %s157
    %s174 = sphi 0, %s158
  $region4: #{tpu_custom_call.1} parent=0 // loop_header_branch
    %16 = sbr.rel (%p14) target = $region8
  $region5: #{tpu_custom_call.1} parent=0 // loop_body
    %s18 = ssub.s32 %s13, 1
    %s19 = ssub.s32 %s13, 2
    %s20 = sadd.s32 %s13, 1
    %s21 = ssub.s32 %s13, %s20
    %p22 = scmp.eq.s32.totalorder %s21, 0
    %s24 = sadd.s32 %s23, 1
    %s25 = scalar_select %p22, %s23, %s24
    %p28 = pneg %p22
    %p29 = scmp.eq.s32.totalorder %s13, 1
    %p30 = por %p28, %p29
    %p31 = scmp.ne.s32.totalorder %s23, %s26
    %p32 = scmp.eq.s32.totalorder %s13, 0
    %p33 = por %p31, %p32
    %p34 = scmp.ne.s32.totalorder %s23, %s26
    %p35 = scmp.eq.s32.totalorder %s18, 1
    %p36 = por %p34, %p35
    %p37 = scmp.ne.s32.totalorder %s26, %s27
    %p38 = scmp.eq.s32.totalorder %s18, 0
    %p39 = por %p37, %p38
    %p40 = scmp.ne.s32.totalorder %s26, %s27
    %p41 = scmp.eq.s32.totalorder %s19, 1
    %p42 = por %p40, %p41
    %p44 = scmp.ne.s32.totalorder %s27, %s43
    %p45 = scmp.eq.s32.totalorder %s19, 0
    %p46 = por %p44, %p45
    %s48 = sadd.s32 %s47, 1
    %p51 = scmp.eq.s32.totalorder %s13, 1
    %p52 = scmp.ne.s32.totalorder %s47, %s49
    %p53 = scmp.eq.s32.totalorder %s13, 0
    %p54 = por %p52, %p53
    %p55 = scmp.ne.s32.totalorder %s47, %s49
    %p56 = scmp.eq.s32.totalorder %s18, 1
    %p57 = por %p55, %p56
    %p58 = scmp.ne.s32.totalorder %s49, %s50
    %p59 = scmp.eq.s32.totalorder %s18, 0
    %p60 = por %p58, %p59
    %p61 = scmp.ne.s32.totalorder %s49, %s50
    %p62 = scmp.eq.s32.totalorder %s19, 1
    %p63 = por %p61, %p62
    %p65 = scmp.ne.s32.totalorder %s50, %s64
    %p66 = scmp.eq.s32.totalorder %s19, 0
    %p67 = por %p65, %p66
    %s69 = sadd.s32 %s68, 1
    %p72 = scmp.eq.s32.totalorder %s13, 1
    %p73 = scmp.ne.s32.totalorder %s68, %s70
    %p74 = scmp.eq.s32.totalorder %s13, 0
    %p75 = por %p73, %p74
    %p76 = scmp.ne.s32.totalorder %s68, %s70
    %p77 = scmp.eq.s32.totalorder %s18, 1
    %p78 = por %p76, %p77
    %p79 = scmp.ne.s32.totalorder %s70, %s71
    %p80 = scmp.eq.s32.totalorder %s18, 0
    %p81 = por %p79, %p80
    %p82 = scmp.ne.s32.totalorder %s70, %s71
    %p83 = scmp.eq.s32.totalorder %s19, 1
    %p84 = por %p82, %p83
    %p86 = scmp.ne.s32.totalorder %s71, %s85
    %p87 = scmp.eq.s32.totalorder %s19, 0
    %p88 = por %p86, %p87
    %s90 = sadd.s32 %s89, 1
    %p93 = scmp.eq.s32.totalorder %s13, 1
    %p94 = scmp.ne.s32.totalorder %s89, %s91
    %p95 = scmp.eq.s32.totalorder %s13, 0
    %p96 = por %p94, %p95
    %p97 = scmp.ne.s32.totalorder %s89, %s91
    %p98 = scmp.eq.s32.totalorder %s18, 1
    %p99 = por %p97, %p98
    %p100 = scmp.ne.s32.totalorder %s91, %s92
    %p101 = scmp.eq.s32.totalorder %s18, 0
    %p102 = por %p100, %p101
    %p103 = scmp.ne.s32.totalorder %s91, %s92
    %p104 = scmp.eq.s32.totalorder %s19, 1
    %p105 = por %p103, %p104
    %p107 = scmp.ne.s32.totalorder %s92, %s106
    %p108 = scmp.eq.s32.totalorder %s19, 0
    %p109 = por %p107, %p108
    %s111 = sadd.s32 %s110, 1
    %p114 = scmp.eq.s32.totalorder %s13, 1
    %p115 = scmp.ne.s32.totalorder %s110, %s112
    %p116 = scmp.eq.s32.totalorder %s13, 0
    %p117 = por %p115, %p116
    %p118 = scmp.ne.s32.totalorder %s110, %s112
    %p119 = scmp.eq.s32.totalorder %s18, 1
    %p120 = por %p118, %p119
    %p121 = scmp.ne.s32.totalorder %s112, %s113
    %p122 = scmp.eq.s32.totalorder %s18, 0
    %p123 = por %p121, %p122
    %p124 = scmp.ne.s32.totalorder %s112, %s113
    %p125 = scmp.eq.s32.totalorder %s19, 1
    %p126 = por %p124, %p125
    %p128 = scmp.ne.s32.totalorder %s113, %s127
    %p129 = scmp.eq.s32.totalorder %s19, 0
    %p130 = por %p128, %p129
    %s132 = sadd.s32 %s131, 1
    %p135 = scmp.eq.s32.totalorder %s13, 1
    %p136 = scmp.ne.s32.totalorder %s131, %s133
    %p137 = scmp.eq.s32.totalorder %s13, 0
    %p138 = por %p136, %p137
    %p139 = scmp.ne.s32.totalorder %s131, %s133
    %p140 = scmp.eq.s32.totalorder %s18, 1
    %p141 = por %p139, %p140
    %p142 = scmp.ne.s32.totalorder %s133, %s134
    %p143 = scmp.eq.s32.totalorder %s18, 0
    %p144 = por %p142, %p143
    %p145 = scmp.ne.s32.totalorder %s133, %s134
    %p146 = scmp.eq.s32.totalorder %s19, 1
    %p147 = por %p145, %p146
    %p149 = scmp.ne.s32.totalorder %s134, %s148
    %p150 = scmp.eq.s32.totalorder %s19, 0
    %p151 = por %p149, %p150
    %s152 = ssub.s32 %s13, %s20
    %p153 = scmp.eq.s32.totalorder %s152, 0
    %s155 = sadd.s32 %s154, 1
    %s156 = scalar_select %p153, %s154, %s155
    %p159 = pneg %p153
    %p160 = scmp.eq.s32.totalorder %s13, 1
    %p161 = por %p159, %p160
    %p162 = scmp.ne.s32.totalorder %s154, %s157
    %p163 = scmp.eq.s32.totalorder %s13, 0
    %p164 = por %p162, %p163
    %p165 = scmp.ne.s32.totalorder %s154, %s157
    %p166 = scmp.eq.s32.totalorder %s18, 1
    %p167 = por %p165, %p166
    %p168 = scmp.ne.s32.totalorder %s157, %s158
    %p169 = scmp.eq.s32.totalorder %s18, 0
    %p170 = por %p168, %p169
    %p171 = scmp.ne.s32.totalorder %s157, %s158
    %p172 = scmp.eq.s32.totalorder %s19, 1
    %p173 = por %p171, %p172
    %p175 = scmp.ne.s32.totalorder %s158, %s174
    %p176 = scmp.eq.s32.totalorder %s19, 0
    %p177 = por %p175, %p176
    %p178 = scmp.le.s32.totalorder 1, %s13
    %p179 = scmp.lt.s32.totalorder %s13, 3
    %p180 = pnand %p178, %p179
    %p181 = pneg %p180
    // Predicated region
    $region9: #{tpu_custom_call.1} parent=5 // pred_check
      _
    $region10: #{tpu_custom_call.1} parent=5 // pred_check_branch
      %183 = sbr.rel (%p180) target = $region12
    $region11: #{tpu_custom_call.1} parent=5 // pred_region
      %s184 = ssub.s32 %s13, 1
      // Predicated region
      $region13: #{tpu_custom_call.1} parent=11 // pred_check
        %p185 = pneg %p60
      $region14: #{tpu_custom_call.1} parent=11 // pred_check_branch
        %187 = sbr.rel (%p185) target = $region16
      $region15: #{tpu_custom_call.1} parent=11 // pred_region
        _
      $region16: #{tpu_custom_call.1} parent=11 // pred_fallthru
        _
      // Predicated region
      $region17: #{tpu_custom_call.1} parent=11 // pred_check
        %p188 = pneg %p81
      $region18: #{tpu_custom_call.1} parent=11 // pred_check_branch
        %190 = sbr.rel (%p188) target = $region20
      $region19: #{tpu_custom_call.1} parent=11 // pred_region
        _
      $region20: #{tpu_custom_call.1} parent=11 // pred_fallthru
        _
      // Predicated region
      $region21: #{tpu_custom_call.1} parent=11 // pred_check
        %p191 = pneg %p102
      $region22: #{tpu_custom_call.1} parent=11 // pred_check_branch
        %193 = sbr.rel (%p191) target = $region24
      $region23: #{tpu_custom_call.1} parent=11 // pred_region
        _
      $region24: #{tpu_custom_call.1} parent=11 // pred_fallthru
        _
      // Predicated region
      $region25: #{tpu_custom_call.1} parent=11 // pred_check
        %p194 = pneg %p123
      $region26: #{tpu_custom_call.1} parent=11 // pred_check_branch
        %196 = sbr.rel (%p194) target = $region28
      $region27: #{tpu_custom_call.1} parent=11 // pred_region
        _
      $region28: #{tpu_custom_call.1} parent=11 // pred_fallthru
        _
      // Predicated region
      $region29: #{tpu_custom_call.1} parent=11 // pred_check
        %p197 = pneg %p144
      $region30: #{tpu_custom_call.1} parent=11 // pred_check_branch
        %199 = sbr.rel (%p197) target = $region32
      $region31: #{tpu_custom_call.1} parent=11 // pred_region
        _
      $region32: #{tpu_custom_call.1} parent=11 // pred_fallthru
        _
    $region12: #{tpu_custom_call.1} parent=5 // pred_fallthru
      _
    %p200 = scmp.lt.s32.totalorder %s13, 2
    // Predicated region
    $region33: #{tpu_custom_call.1} parent=5 // pred_check
      %p201 = pneg %p200
    $region34: #{tpu_custom_call.1} parent=5 // pred_check_branch
      %203 = sbr.rel (%p201) target = $region36
    $region35: #{tpu_custom_call.1} parent=5 // pred_region
      // Predicated region
      $region37: #{tpu_custom_call.1} parent=35 // pred_check
        %p204 = pneg %p33
      $region38: #{tpu_custom_call.1} parent=35 // pred_check_branch
        %206 = sbr.rel (%p204) target = $region40
      $region39: #{tpu_custom_call.1} parent=35 // pred_region
        %s207 = smul.u32 16, %s13
        %p208 = scmp.lt.s32.totalorder %s207, 31
        %s209 = scalar_select %p208, %s207, 31
        %s210 = smul.addr %s209, 2
        %s211 = smul.addr %s210, 8
        %s212 = scalar_lea.vmem %s0, %s211
        %s213 = smul.u32 16, %s13
      $region40: #{tpu_custom_call.1} parent=35 // pred_fallthru
        _
    $region36: #{tpu_custom_call.1} parent=5 // pred_fallthru
      _
    %p214 = scmp.le.s32.totalorder 1, %s13
    %p215 = scmp.lt.s32.totalorder %s13, 3
    %p216 = pnand %p214, %p215
    %p217 = pneg %p216
    // Predicated region
    $region41: #{tpu_custom_call.1} parent=5 // pred_check
      _
    $region42: #{tpu_custom_call.1} parent=5 // pred_check_branch
      %219 = sbr.rel (%p216) target = $region44
    $region43: #{tpu_custom_call.1} parent=5 // pred_region
      %s220 = ssub.s32 %s13, 1
      %s221 = smul.u32 16, %s18
      %p222 = scmp.lt.s32.totalorder %s221, 31
      %s223 = scalar_select %p222, %s221, 31
      %s224 = smul.addr %s223, 2
      %s225 = smul.addr %s224, 8
      %s226 = scalar_lea.vmem %s0, %s225
      %p227 = pneg %p39
      %p228 = pneg %p36
      %p229 = pneg %p60
      %p230 = pneg %p57
      %p231 = pneg %p81
      %p232 = pneg %p78
      %p233 = pneg %p102
      %p234 = pneg %p99
      %p235 = pneg %p123
      %p236 = pneg %p120
      %p237 = pneg %p144
      %p238 = pneg %p141
      %p239 = pneg %p170
      %p240 = pneg %p167
      %s241 = smul.u32 2, %s18
      %p242 = scmp.lt.s32.totalorder %s241, 3
      %s243 = scalar_select %p242, %s241, 3
      %s244 = smul.addr %s243, 8
      %s245 = scalar_lea.vmem %s6, %s244
      %s246 = smul.u32 16, %s18
      %p247 = scmp.lt.s32.totalorder %s246, 31
      %s248 = scalar_select %p247, %s246, 31
      %s249 = smul.addr %s248, 2
      %s250 = smul.addr %s249, 8
      %s251 = scalar_lea.vmem %s0, %s250
      %s252 = smul.u32 16, %s18
      %s253 = smul.u32 2, %s18
      %p254 = scmp.lt.s32.totalorder %s253, 3
      %s255 = scalar_select %p254, %s253, 3
      %s256 = smul.addr %s255, 8
      %s257 = scalar_lea.vmem %s6, %s256
      %s258 = smul.u32 2, %s18
      %v259 = vld [vmem:[%s251] sm:$0xff]
      %v260 = vld [vmem:[%s251 + $0x8] sm:$0xff]
      %v261 = vld [vmem:[%s251 + $0x10] sm:$0xff]
      %v262 = vld [vmem:[%s251 + $0x18] sm:$0xff]
      %v263 = vld [vmem:[%s251 + $0x20] sm:$0xff]
      %v264 = vld [vmem:[%s251 + $0x28] sm:$0xff]
      %v265 = vld [vmem:[%s251 + $0x30] sm:$0xff]
      %v266 = vld [vmem:[%s251 + $0x38] sm:$0xff]
      %v267 = vld [vmem:[%s251 + $0x40] sm:$0xff]
      %v268 = vld [vmem:[%s251 + $0x48] sm:$0xff]
      %v269 = vld [vmem:[%s251 + $0x50] sm:$0xff]
      %v270 = vld [vmem:[%s251 + $0x58] sm:$0xff]
      %v271 = vld [vmem:[%s251 + $0x60] sm:$0xff]
      %v272 = vld [vmem:[%s251 + $0x68] sm:$0xff]
      %v273 = vld [vmem:[%s251 + $0x70] sm:$0xff]
      %v274 = vld [vmem:[%s251 + $0x78] sm:$0xff]
      %v275 = vld [vmem:[%s251 + $0x80] sm:$0xff]
      %v276 = vld [vmem:[%s251 + $0x88] sm:$0xff]
      %v277 = vld [vmem:[%s251 + $0x90] sm:$0xff]
      %v278 = vld [vmem:[%s251 + $0x98] sm:$0xff]
      %v279 = vld [vmem:[%s251 + $0xa0] sm:$0xff]
      %v280 = vld [vmem:[%s251 + $0xa8] sm:$0xff]
      %v281 = vld [vmem:[%s251 + $0xb0] sm:$0xff]
      %v282 = vld [vmem:[%s251 + $0xb8] sm:$0xff]
      %v283 = vld [vmem:[%s251 + $0xc0] sm:$0xff]
      %v284 = vld [vmem:[%s251 + $0xc8] sm:$0xff]
      %v285 = vld [vmem:[%s251 + $0xd0] sm:$0xff]
      %v286 = vld [vmem:[%s251 + $0xd8] sm:$0xff]
      %v287 = vld [vmem:[%s251 + $0xe0] sm:$0xff]
      %v288 = vld [vmem:[%s251 + $0xe8] sm:$0xff]
      %v289 = vld [vmem:[%s251 + $0xf0] sm:$0xff]
      %v290 = vld [vmem:[%s251 + $0xf8] sm:$0xff]
      %v291 = vlaneseq
      %v292 = vand.u32 %v291, 127
      %293 = vset.pattern.permute.xlu0 0
      %294 = vperm.xlu0 %293, %v259
      %v295 = vpop.permute.xlu0 %294
      %296 = vset.pattern.permute.xlu0 0
      %297 = vperm.xlu0 %296, %v260
      %v298 = vpop.permute.xlu0 %297
      %299 = vset.pattern.permute.xlu0 0
      %300 = vperm.xlu0 %299, %v261
      %v301 = vpop.permute.xlu0 %300
      %302 = vset.pattern.permute.xlu0 0
      %303 = vperm.xlu0 %302, %v262
      %v304 = vpop.permute.xlu0 %303
      %305 = vset.pattern.permute.xlu0 0
      %306 = vperm.xlu0 %305, %v263
      %v307 = vpop.permute.xlu0 %306
      %308 = vset.pattern.permute.xlu0 0
      %309 = vperm.xlu0 %308, %v264
      %v310 = vpop.permute.xlu0 %309
      %311 = vset.pattern.permute.xlu0 0
      %312 = vperm.xlu0 %311, %v265
      %v313 = vpop.permute.xlu0 %312
      %314 = vset.pattern.permute.xlu0 0
      %315 = vperm.xlu0 %314, %v266
      %v316 = vpop.permute.xlu0 %315
      %317 = vset.pattern.permute.xlu0 0
      %318 = vperm.xlu0 %317, %v267
      %v319 = vpop.permute.xlu0 %318
      %320 = vset.pattern.permute.xlu0 0
      %321 = vperm.xlu0 %320, %v268
      %v322 = vpop.permute.xlu0 %321
      %323 = vset.pattern.permute.xlu0 0
      %324 = vperm.xlu0 %323, %v269
      %v325 = vpop.permute.xlu0 %324
      %326 = vset.pattern.permute.xlu0 0
      %327 = vperm.xlu0 %326, %v270
      %v328 = vpop.permute.xlu0 %327
      %329 = vset.pattern.permute.xlu0 0
      %330 = vperm.xlu0 %329, %v271
      %v331 = vpop.permute.xlu0 %330
      %332 = vset.pattern.permute.xlu0 0
      %333 = vperm.xlu0 %332, %v272
      %v334 = vpop.permute.xlu0 %333
      %335 = vset.pattern.permute.xlu0 0
      %336 = vperm.xlu0 %335, %v273
      %v337 = vpop.permute.xlu0 %336
      %338 = vset.pattern.permute.xlu0 0
      %339 = vperm.xlu0 %338, %v274
      %v340 = vpop.permute.xlu0 %339
      %341 = vset.pattern.permute.xlu0 0
      %342 = vperm.xlu0 %341, %v275
      %v343 = vpop.permute.xlu0 %342
      %344 = vset.pattern.permute.xlu0 0
      %345 = vperm.xlu0 %344, %v276
      %v346 = vpop.permute.xlu0 %345
      %347 = vset.pattern.permute.xlu0 0
      %348 = vperm.xlu0 %347, %v277
      %v349 = vpop.permute.xlu0 %348
      %350 = vset.pattern.permute.xlu0 0
      %351 = vperm.xlu0 %350, %v278
      %v352 = vpop.permute.xlu0 %351
      %353 = vset.pattern.permute.xlu0 0
      %354 = vperm.xlu0 %353, %v279
      %v355 = vpop.permute.xlu0 %354
      %356 = vset.pattern.permute.xlu0 0
      %357 = vperm.xlu0 %356, %v280
      %v358 = vpop.permute.xlu0 %357
      %359 = vset.pattern.permute.xlu0 0
      %360 = vperm.xlu0 %359, %v281
      %v361 = vpop.permute.xlu0 %360
      %362 = vset.pattern.permute.xlu0 0
      %363 = vperm.xlu0 %362, %v282
      %v364 = vpop.permute.xlu0 %363
      %365 = vset.pattern.permute.xlu0 0
      %366 = vperm.xlu0 %365, %v283
      %v367 = vpop.permute.xlu0 %366
      %368 = vset.pattern.permute.xlu0 0
      %369 = vperm.xlu0 %368, %v284
      %v370 = vpop.permute.xlu0 %369
      %371 = vset.pattern.permute.xlu0 0
      %372 = vperm.xlu0 %371, %v285
      %v373 = vpop.permute.xlu0 %372
      %374 = vset.pattern.permute.xlu0 0
      %375 = vperm.xlu0 %374, %v286
      %v376 = vpop.permute.xlu0 %375
      %377 = vset.pattern.permute.xlu0 0
      %378 = vperm.xlu0 %377, %v287
      %v379 = vpop.permute.xlu0 %378
      %380 = vset.pattern.permute.xlu0 0
      %381 = vperm.xlu0 %380, %v288
      %v382 = vpop.permute.xlu0 %381
      %383 = vset.pattern.permute.xlu0 0
      %384 = vperm.xlu0 %383, %v289
      %v385 = vpop.permute.xlu0 %384
      %386 = vset.pattern.permute.xlu0 0
      %387 = vperm.xlu0 %386, %v290
      %v388 = vpop.permute.xlu0 %387
      %vm389 = vcmp.eq.s32.totalorder %v295, %v292
      %vm390 = vcmp.eq.s32.totalorder %v298, %v292
      %vm391 = vcmp.eq.s32.totalorder %v301, %v292
      %vm392 = vcmp.eq.s32.totalorder %v304, %v292
      %vm393 = vcmp.eq.s32.totalorder %v307, %v292
      %vm394 = vcmp.eq.s32.totalorder %v310, %v292
      %vm395 = vcmp.eq.s32.totalorder %v313, %v292
      %vm396 = vcmp.eq.s32.totalorder %v316, %v292
      %vm397 = vcmp.eq.s32.totalorder %v319, %v292
      %vm398 = vcmp.eq.s32.totalorder %v322, %v292
      %vm399 = vcmp.eq.s32.totalorder %v325, %v292
      %vm400 = vcmp.eq.s32.totalorder %v328, %v292
      %vm401 = vcmp.eq.s32.totalorder %v331, %v292
      %vm402 = vcmp.eq.s32.totalorder %v334, %v292
      %vm403 = vcmp.eq.s32.totalorder %v337, %v292
      %vm404 = vcmp.eq.s32.totalorder %v340, %v292
      %vm405 = vcmp.eq.s32.totalorder %v343, %v292
      %vm406 = vcmp.eq.s32.totalorder %v346, %v292
      %vm407 = vcmp.eq.s32.totalorder %v349, %v292
      %vm408 = vcmp.eq.s32.totalorder %v352, %v292
      %vm409 = vcmp.eq.s32.totalorder %v355, %v292
      %vm410 = vcmp.eq.s32.totalorder %v358, %v292
      %vm411 = vcmp.eq.s32.totalorder %v361, %v292
      %vm412 = vcmp.eq.s32.totalorder %v364, %v292
      %vm413 = vcmp.eq.s32.totalorder %v367, %v292
      %vm414 = vcmp.eq.s32.totalorder %v370, %v292
      %vm415 = vcmp.eq.s32.totalorder %v373, %v292
      %vm416 = vcmp.eq.s32.totalorder %v376, %v292
      %vm417 = vcmp.eq.s32.totalorder %v379, %v292
      %vm418 = vcmp.eq.s32.totalorder %v382, %v292
      %vm419 = vcmp.eq.s32.totalorder %v385, %v292
      %vm420 = vcmp.eq.s32.totalorder %v388, %v292
      %v421 = vsel %vm389, 1, 0
      %v422 = vsel %vm390, 1, 0
      %v423 = vsel %vm391, 1, 0
      %v424 = vsel %vm392, 1, 0
      %v425 = vsel %vm393, 1, 0
      %v426 = vsel %vm394, 1, 0
      %v427 = vsel %vm395, 1, 0
      %v428 = vsel %vm396, 1, 0
      %v429 = vsel %vm397, 1, 0
      %v430 = vsel %vm398, 1, 0
      %v431 = vsel %vm399, 1, 0
      %v432 = vsel %vm400, 1, 0
      %v433 = vsel %vm401, 1, 0
      %v434 = vsel %vm402, 1, 0
      %v435 = vsel %vm403, 1, 0
      %v436 = vsel %vm404, 1, 0
      %v437 = vsel %vm405, 1, 0
      %v438 = vsel %vm406, 1, 0
      %v439 = vsel %vm407, 1, 0
      %v440 = vsel %vm408, 1, 0
      %v441 = vsel %vm409, 1, 0
      %v442 = vsel %vm410, 1, 0
      %v443 = vsel %vm411, 1, 0
      %v444 = vsel %vm412, 1, 0
      %v445 = vsel %vm413, 1, 0
      %v446 = vsel %vm414, 1, 0
      %v447 = vsel %vm415, 1, 0
      %v448 = vsel %vm416, 1, 0
      %v449 = vsel %vm417, 1, 0
      %v450 = vsel %vm418, 1, 0
      %v451 = vsel %vm419, 1, 0
      %v452 = vsel %vm420, 1, 0
      %v453 = vcvt.s32.f32 %v421
      %v454 = vcvt.s32.f32 %v422
      %v455 = vcvt.s32.f32 %v423
      %v456 = vcvt.s32.f32 %v424
      %v457 = vcvt.s32.f32 %v425
      %v458 = vcvt.s32.f32 %v426
      %v459 = vcvt.s32.f32 %v427
      %v460 = vcvt.s32.f32 %v428
      %v461 = vcvt.s32.f32 %v429
      %v462 = vcvt.s32.f32 %v430
      %v463 = vcvt.s32.f32 %v431
      %v464 = vcvt.s32.f32 %v432
      %v465 = vcvt.s32.f32 %v433
      %v466 = vcvt.s32.f32 %v434
      %v467 = vcvt.s32.f32 %v435
      %v468 = vcvt.s32.f32 %v436
      %v469 = vcvt.s32.f32 %v437
      %v470 = vcvt.s32.f32 %v438
      %v471 = vcvt.s32.f32 %v439
      %v472 = vcvt.s32.f32 %v440
      %v473 = vcvt.s32.f32 %v441
      %v474 = vcvt.s32.f32 %v442
      %v475 = vcvt.s32.f32 %v443
      %v476 = vcvt.s32.f32 %v444
      %v477 = vcvt.s32.f32 %v445
      %v478 = vcvt.s32.f32 %v446
      %v479 = vcvt.s32.f32 %v447
      %v480 = vcvt.s32.f32 %v448
      %v481 = vcvt.s32.f32 %v449
      %v482 = vcvt.s32.f32 %v450
      %v483 = vcvt.s32.f32 %v451
      %v484 = vcvt.s32.f32 %v452
      %v485 = vld [vmem:[%s1] sm:$0xff]
      %v486 = vld [vmem:[%s1 + $0x8] sm:$0xff]
      %v487 = vld [vmem:[%s1 + $0x10] sm:$0xff]
      %v488 = vld [vmem:[%s1 + $0x18] sm:$0xff]
      %v489 = vld [vmem:[%s1 + $0x20] sm:$0xff]
      %v490 = vld [vmem:[%s1 + $0x28] sm:$0xff]
      %v491 = vld [vmem:[%s1 + $0x30] sm:$0xff]
      %v492 = vld [vmem:[%s1 + $0x38] sm:$0xff]
      %v493 = vld [vmem:[%s1 + $0x40] sm:$0xff]
      %v494 = vld [vmem:[%s1 + $0x48] sm:$0xff]
      %v495 = vld [vmem:[%s1 + $0x50] sm:$0xff]
      %v496 = vld [vmem:[%s1 + $0x58] sm:$0xff]
      %v497 = vld [vmem:[%s1 + $0x60] sm:$0xff]
      %v498 = vld [vmem:[%s1 + $0x68] sm:$0xff]
      %v499 = vld [vmem:[%s1 + $0x70] sm:$0xff]
      %v500 = vld [vmem:[%s1 + $0x78] sm:$0xff]
      %501 = vmatpush.msra.mxu0 %v500
      %502 = vmatpush.msra.mxu0 %v499
      %503 = vmatpush.msra.mxu0 %v498
      %504 = vmatpush.msra.mxu0 %v497
      %505 = vmatpush.msra.mxu0 %v496
      %506 = vmatpush.msra.mxu0 %v495
      %507 = vmatpush.msra.mxu0 %v494
      %508 = vmatpush.msra.mxu0 %v493
      %509 = vmatpush.msra.mxu0 %v492
      %510 = vmatpush.msra.mxu0 %v491
      %511 = vmatpush.msra.mxu0 %v490
      %512 = vmatpush.msra.mxu0 %v489
      %513 = vmatpush.msra.mxu0 %v488
      %514 = vmatpush.msra.mxu0 %v487
      %515 = vmatpush.msra.mxu0 %v486
      %516 = vmatpush.msra.mxu0 %v485
      %517 = vmatmul.f32.gmra.mxu0 %v453
      %v518 = vpop.f32.mrf.mxu0
      %v519 = vadd.f32 0.0, %v518
      %520 = vmatmul.f32.gmra.mxu0 %v454
      %v521 = vpop.f32.mrf.mxu0
      %v522 = vadd.f32 0.0, %v521
      %523 = vmatmul.f32.gmra.mxu0 %v455
      %v524 = vpop.f32.mrf.mxu0
      %v525 = vadd.f32 0.0, %v524
      %526 = vmatmul.f32.gmra.mxu0 %v456
      %v527 = vpop.f32.mrf.mxu0
      %v528 = vadd.f32 0.0, %v527
      %529 = vmatmul.f32.gmra.mxu0 %v457
      %v530 = vpop.f32.mrf.mxu0
      %v531 = vadd.f32 0.0, %v530
      %532 = vmatmul.f32.gmra.mxu0 %v458
      %v533 = vpop.f32.mrf.mxu0
      %v534 = vadd.f32 0.0, %v533
      %535 = vmatmul.f32.gmra.mxu0 %v459
      %v536 = vpop.f32.mrf.mxu0
      %v537 = vadd.f32 0.0, %v536
      %538 = vmatmul.f32.gmra.mxu0 %v460
      %v539 = vpop.f32.mrf.mxu0
      %v540 = vadd.f32 0.0, %v539
      %541 = vmatmul.f32.gmra.mxu0 %v461
      %v542 = vpop.f32.mrf.mxu0
      %v543 = vadd.f32 0.0, %v542
      %544 = vmatmul.f32.gmra.mxu0 %v462
      %v545 = vpop.f32.mrf.mxu0
      %v546 = vadd.f32 0.0, %v545
      %547 = vmatmul.f32.gmra.mxu0 %v463
      %v548 = vpop.f32.mrf.mxu0
      %v549 = vadd.f32 0.0, %v548
      %550 = vmatmul.f32.gmra.mxu0 %v464
      %v551 = vpop.f32.mrf.mxu0
      %v552 = vadd.f32 0.0, %v551
      %553 = vmatmul.f32.gmra.mxu0 %v465
      %v554 = vpop.f32.mrf.mxu0
      %v555 = vadd.f32 0.0, %v554
      %556 = vmatmul.f32.gmra.mxu0 %v466
      %v557 = vpop.f32.mrf.mxu0
      %v558 = vadd.f32 0.0, %v557
      %559 = vmatmul.f32.gmra.mxu0 %v467
      %v560 = vpop.f32.mrf.mxu0
      %v561 = vadd.f32 0.0, %v560
      %562 = vmatmul.f32.gmra.mxu0 %v468
      %v563 = vpop.f32.mrf.mxu0
      %v564 = vadd.f32 0.0, %v563
      %565 = vmatmul.f32.gmra.mxu0 %v469
      %v566 = vpop.f32.mrf.mxu0
      %v567 = vadd.f32 0.0, %v566
      %568 = vmatmul.f32.gmra.mxu0 %v470
      %v569 = vpop.f32.mrf.mxu0
      %v570 = vadd.f32 0.0, %v569
      %571 = vmatmul.f32.gmra.mxu0 %v471
      %v572 = vpop.f32.mrf.mxu0
      %v573 = vadd.f32 0.0, %v572
      %574 = vmatmul.f32.gmra.mxu0 %v472
      %v575 = vpop.f32.mrf.mxu0
      %v576 = vadd.f32 0.0, %v575
      %577 = vmatmul.f32.gmra.mxu0 %v473
      %v578 = vpop.f32.mrf.mxu0
      %v579 = vadd.f32 0.0, %v578
      %580 = vmatmul.f32.gmra.mxu0 %v474
      %v581 = vpop.f32.mrf.mxu0
      %v582 = vadd.f32 0.0, %v581
      %583 = vmatmul.f32.gmra.mxu0 %v475
      %v584 = vpop.f32.mrf.mxu0
      %v585 = vadd.f32 0.0, %v584
      %586 = vmatmul.f32.gmra.mxu0 %v476
      %v587 = vpop.f32.mrf.mxu0
      %v588 = vadd.f32 0.0, %v587
      %589 = vmatmul.f32.gmra.mxu0 %v477
      %v590 = vpop.f32.mrf.mxu0
      %v591 = vadd.f32 0.0, %v590
      %592 = vmatmul.f32.gmra.mxu0 %v478
      %v593 = vpop.f32.mrf.mxu0
      %v594 = vadd.f32 0.0, %v593
      %595 = vmatmul.f32.gmra.mxu0 %v479
      %v596 = vpop.f32.mrf.mxu0
      %v597 = vadd.f32 0.0, %v596
      %598 = vmatmul.f32.gmra.mxu0 %v480
      %v599 = vpop.f32.mrf.mxu0
      %v600 = vadd.f32 0.0, %v599
      %601 = vmatmul.f32.gmra.mxu0 %v481
      %v602 = vpop.f32.mrf.mxu0
      %v603 = vadd.f32 0.0, %v602
      %604 = vmatmul.f32.gmra.mxu0 %v482
      %v605 = vpop.f32.mrf.mxu0
      %v606 = vadd.f32 0.0, %v605
      %607 = vmatmul.f32.gmra.mxu0 %v483
      %v608 = vpop.f32.mrf.mxu0
      %v609 = vadd.f32 0.0, %v608
      %610 = vmatmul.f32.gmra.mxu0 %v484
      %v611 = vpop.f32.mrf.mxu0
      %v612 = vadd.f32 0.0, %v611
      %613 = vdwg.mxu0
      %v614 = vld [vmem:[%s2] sm:$0xff]
      %v615 = vld [vmem:[%s2 + $0x8] sm:$0xff]
      %v616 = vld [vmem:[%s2 + $0x10] sm:$0xff]
      %v617 = vld [vmem:[%s2 + $0x18] sm:$0xff]
      %vm618 = vcmask 261120
      %v620 = vsel %vm618, %v519, 0
      %v623 = vsel %vm618, %v522, 0
      %v626 = vsel %vm618, %v525, 0
      %v629 = vsel %vm618, %v528, 0
      %v632 = vsel %vm618, %v531, 0
      %v635 = vsel %vm618, %v534, 0
      %v638 = vsel %vm618, %v537, 0
      %v641 = vsel %vm618, %v540, 0
      %v644 = vsel %vm618, %v543, 0
      %v647 = vsel %vm618, %v546, 0
      %v650 = vsel %vm618, %v549, 0
      %v653 = vsel %vm618, %v552, 0
      %v656 = vsel %vm618, %v555, 0
      %v659 = vsel %vm618, %v558, 0
      %v662 = vsel %vm618, %v561, 0
      %v665 = vsel %vm618, %v564, 0
      %v668 = vsel %vm618, %v567, 0
      %v671 = vsel %vm618, %v570, 0
      %v674 = vsel %vm618, %v573, 0
      %v677 = vsel %vm618, %v576, 0
      %v680 = vsel %vm618, %v579, 0
      %v683 = vsel %vm618, %v582, 0
      %v686 = vsel %vm618, %v585, 0
      %v689 = vsel %vm618, %v588, 0
      %v692 = vsel %vm618, %v591, 0
      %v695 = vsel %vm618, %v594, 0
      %v698 = vsel %vm618, %v597, 0
      %v701 = vsel %vm618, %v600, 0
      %v704 = vsel %vm618, %v603, 0
      %v707 = vsel %vm618, %v606, 0
      %v710 = vsel %vm618, %v609, 0
      %v713 = vsel %vm618, %v612, 0
      %715 = vmatpush.msra.mxu0 0.0
      %716 = vmatpush.msra.mxu0 0.0
      %717 = vmatpush.msra.mxu0 0.0
      %718 = vmatpush.msra.mxu0 0.0
      %719 = vmatpush.msra.mxu0 0.0
      %720 = vmatpush.msra.mxu0 0.0
      %721 = vmatpush.msra.mxu0 0.0
      %722 = vmatpush.msra.mxu0 0.0
      %723 = vmatpush.msra.mxu0 0.0
      %724 = vmatpush.msra.mxu0 0.0
      %725 = vmatpush.msra.mxu0 0.0
      %726 = vmatpush.msra.mxu0 0.0
      %727 = vmatpush.msra.mxu0 %v617
      %728 = vmatpush.msra.mxu0 %v616
      %729 = vmatpush.msra.mxu0 %v615
      %730 = vmatpush.msra.mxu0 %v614
      %731 = vmatmul.f32.gmra.mxu0 %v620
      %v732 = vpop.f32.mrf.mxu0
      %v733 = vadd.f32 0.0, %v732
      %734 = vmatmul.f32.gmra.mxu0 %v623
      %v735 = vpop.f32.mrf.mxu0
      %v736 = vadd.f32 0.0, %v735
      %737 = vmatmul.f32.gmra.mxu0 %v626
      %v738 = vpop.f32.mrf.mxu0
      %v739 = vadd.f32 0.0, %v738
      %740 = vmatmul.f32.gmra.mxu0 %v629
      %v741 = vpop.f32.mrf.mxu0
      %v742 = vadd.f32 0.0, %v741
      %743 = vmatmul.f32.gmra.mxu0 %v632
      %v744 = vpop.f32.mrf.mxu0
      %v745 = vadd.f32 0.0, %v744
      %746 = vmatmul.f32.gmra.mxu0 %v635
      %v747 = vpop.f32.mrf.mxu0
      %v748 = vadd.f32 0.0, %v747
      %749 = vmatmul.f32.gmra.mxu0 %v638
      %v750 = vpop.f32.mrf.mxu0
      %v751 = vadd.f32 0.0, %v750
      %752 = vmatmul.f32.gmra.mxu0 %v641
      %v753 = vpop.f32.mrf.mxu0
      %v754 = vadd.f32 0.0, %v753
      %755 = vmatmul.f32.gmra.mxu0 %v644
      %v756 = vpop.f32.mrf.mxu0
      %v757 = vadd.f32 0.0, %v756
      %758 = vmatmul.f32.gmra.mxu0 %v647
      %v759 = vpop.f32.mrf.mxu0
      %v760 = vadd.f32 0.0, %v759
      %761 = vmatmul.f32.gmra.mxu0 %v650
      %v762 = vpop.f32.mrf.mxu0
      %v763 = vadd.f32 0.0, %v762
      %764 = vmatmul.f32.gmra.mxu0 %v653
      %v765 = vpop.f32.mrf.mxu0
      %v766 = vadd.f32 0.0, %v765
      %767 = vmatmul.f32.gmra.mxu0 %v656
      %v768 = vpop.f32.mrf.mxu0
      %v769 = vadd.f32 0.0, %v768
      %770 = vmatmul.f32.gmra.mxu0 %v659
      %v771 = vpop.f32.mrf.mxu0
      %v772 = vadd.f32 0.0, %v771
      %773 = vmatmul.f32.gmra.mxu0 %v662
      %v774 = vpop.f32.mrf.mxu0
      %v775 = vadd.f32 0.0, %v774
      %776 = vmatmul.f32.gmra.mxu0 %v665
      %v777 = vpop.f32.mrf.mxu0
      %v778 = vadd.f32 0.0, %v777
      %779 = vmatmul.f32.gmra.mxu0 %v668
      %v780 = vpop.f32.mrf.mxu0
      %v781 = vadd.f32 0.0, %v780
      %782 = vmatmul.f32.gmra.mxu0 %v671
      %v783 = vpop.f32.mrf.mxu0
      %v784 = vadd.f32 0.0, %v783
      %785 = vmatmul.f32.gmra.mxu0 %v674
      %v786 = vpop.f32.mrf.mxu0
      %v787 = vadd.f32 0.0, %v786
      %788 = vmatmul.f32.gmra.mxu0 %v677
      %v789 = vpop.f32.mrf.mxu0
      %v790 = vadd.f32 0.0, %v789
      %791 = vmatmul.f32.gmra.mxu0 %v680
      %v792 = vpop.f32.mrf.mxu0
      %v793 = vadd.f32 0.0, %v792
      %794 = vmatmul.f32.gmra.mxu0 %v683
      %v795 = vpop.f32.mrf.mxu0
      %v796 = vadd.f32 0.0, %v795
      %797 = vmatmul.f32.gmra.mxu0 %v686
      %v798 = vpop.f32.mrf.mxu0
      %v799 = vadd.f32 0.0, %v798
      %800 = vmatmul.f32.gmra.mxu0 %v689
      %v801 = vpop.f32.mrf.mxu0
      %v802 = vadd.f32 0.0, %v801
      %803 = vmatmul.f32.gmra.mxu0 %v692
      %v804 = vpop.f32.mrf.mxu0
      %v805 = vadd.f32 0.0, %v804
      %806 = vmatmul.f32.gmra.mxu0 %v695
      %v807 = vpop.f32.mrf.mxu0
      %v808 = vadd.f32 0.0, %v807
      %809 = vmatmul.f32.gmra.mxu0 %v698
      %v810 = vpop.f32.mrf.mxu0
      %v811 = vadd.f32 0.0, %v810
      %812 = vmatmul.f32.gmra.mxu0 %v701
      %v813 = vpop.f32.mrf.mxu0
      %v814 = vadd.f32 0.0, %v813
      %815 = vmatmul.f32.gmra.mxu0 %v704
      %v816 = vpop.f32.mrf.mxu0
      %v817 = vadd.f32 0.0, %v816
      %818 = vmatmul.f32.gmra.mxu0 %v707
      %v819 = vpop.f32.mrf.mxu0
      %v820 = vadd.f32 0.0, %v819
      %821 = vmatmul.f32.gmra.mxu0 %v710
      %v822 = vpop.f32.mrf.mxu0
      %v823 = vadd.f32 0.0, %v822
      %824 = vmatmul.f32.gmra.mxu0 %v713
      %v825 = vpop.f32.mrf.mxu0
      %v826 = vadd.f32 0.0, %v825
      %827 = vdwg.mxu0
      %vm860 = vcmask 1040384
      %v861 = vrot.slane %v733, 7
      %v862 = vrot.slane %v736, 7
      %v863 = vsel %vm860, %v861, %v862
      %v864 = vrot.slane %v739, 7
      %v865 = vrot.slane %v742, 7
      %v866 = vsel %vm860, %v864, %v865
      %v867 = vrot.slane %v745, 7
      %v868 = vrot.slane %v748, 7
      %v869 = vsel %vm860, %v867, %v868
      %v870 = vrot.slane %v751, 7
      %v871 = vrot.slane %v754, 7
      %v872 = vsel %vm860, %v870, %v871
      %v873 = vrot.slane %v757, 7
      %v874 = vrot.slane %v760, 7
      %v875 = vsel %vm860, %v873, %v874
      %v876 = vrot.slane %v763, 7
      %v877 = vrot.slane %v766, 7
      %v878 = vsel %vm860, %v876, %v877
      %v879 = vrot.slane %v769, 7
      %v880 = vrot.slane %v772, 7
      %v881 = vsel %vm860, %v879, %v880
      %v882 = vrot.slane %v775, 7
      %v883 = vrot.slane %v778, 7
      %v884 = vsel %vm860, %v882, %v883
      %v885 = vrot.slane %v781, 7
      %v886 = vrot.slane %v784, 7
      %v887 = vsel %vm860, %v885, %v886
      %v888 = vrot.slane %v787, 7
      %v889 = vrot.slane %v790, 7
      %v890 = vsel %vm860, %v888, %v889
      %v891 = vrot.slane %v793, 7
      %v892 = vrot.slane %v796, 7
      %v893 = vsel %vm860, %v891, %v892
      %v894 = vrot.slane %v799, 7
      %v895 = vrot.slane %v802, 7
      %v896 = vsel %vm860, %v894, %v895
      %v897 = vrot.slane %v805, 7
      %v898 = vrot.slane %v808, 7
      %v899 = vsel %vm860, %v897, %v898
      %v900 = vrot.slane %v811, 7
      %v901 = vrot.slane %v814, 7
      %v902 = vsel %vm860, %v900, %v901
      %v903 = vrot.slane %v817, 7
      %v904 = vrot.slane %v820, 7
      %v905 = vsel %vm860, %v903, %v904
      %v906 = vrot.slane %v823, 7
      %v907 = vrot.slane %v826, 7
      %v908 = vsel %vm860, %v906, %v907
      %v957 = vsel %vm860, 0.0, %v861
      %v958 = vsel %vm860, 0.0, %v864
      %v959 = vsel %vm860, 0.0, %v867
      %v960 = vsel %vm860, 0.0, %v870
      %v961 = vsel %vm860, 0.0, %v873
      %v962 = vsel %vm860, 0.0, %v876
      %v963 = vsel %vm860, 0.0, %v879
      %v964 = vsel %vm860, 0.0, %v882
      %v965 = vsel %vm860, 0.0, %v885
      %v966 = vsel %vm860, 0.0, %v888
      %v967 = vsel %vm860, 0.0, %v891
      %v968 = vsel %vm860, 0.0, %v894
      %v969 = vsel %vm860, 0.0, %v897
      %v970 = vsel %vm860, 0.0, %v900
      %v971 = vsel %vm860, 0.0, %v903
      %v972 = vsel %vm860, 0.0, %v906
      %v973 = vsel %vm860, %v862, 0.0
      %v974 = vsel %vm860, %v865, 0.0
      %v975 = vsel %vm860, %v868, 0.0
      %v976 = vsel %vm860, %v871, 0.0
      %v977 = vsel %vm860, %v874, 0.0
      %v978 = vsel %vm860, %v877, 0.0
      %v979 = vsel %vm860, %v880, 0.0
      %v980 = vsel %vm860, %v883, 0.0
      %v981 = vsel %vm860, %v886, 0.0
      %v982 = vsel %vm860, %v889, 0.0
      %v983 = vsel %vm860, %v892, 0.0
      %v984 = vsel %vm860, %v895, 0.0
      %v985 = vsel %vm860, %v898, 0.0
      %v986 = vsel %vm860, %v901, 0.0
      %v987 = vsel %vm860, %v904, 0.0
      %v988 = vsel %vm860, %v907, 0.0
      %v989 = vadd.f32 %v957, 0.0
      %v990 = vadd.f32 %v863, 0.0
      %v991 = vadd.f32 %v958, 0.0
      %v992 = vadd.f32 %v866, 0.0
      %v993 = vadd.f32 %v959, 0.0
      %v994 = vadd.f32 %v869, 0.0
      %v995 = vadd.f32 %v960, 0.0
      %v996 = vadd.f32 %v872, 0.0
      %v997 = vadd.f32 %v961, 0.0
      %v998 = vadd.f32 %v875, 0.0
      %v999 = vadd.f32 %v962, 0.0
      %v1000 = vadd.f32 %v878, 0.0
      %v1001 = vadd.f32 %v963, 0.0
      %v1002 = vadd.f32 %v881, 0.0
      %v1003 = vadd.f32 %v964, 0.0
      %v1004 = vadd.f32 %v884, 0.0
      %v1005 = vadd.f32 %v965, 0.0
      %v1006 = vadd.f32 %v887, 0.0
      %v1007 = vadd.f32 %v966, 0.0
      %v1008 = vadd.f32 %v890, 0.0
      %v1009 = vadd.f32 %v967, 0.0
      %v1010 = vadd.f32 %v893, 0.0
      %v1011 = vadd.f32 %v968, 0.0
      %v1012 = vadd.f32 %v896, 0.0
      %v1013 = vadd.f32 %v969, 0.0
      %v1014 = vadd.f32 %v899, 0.0
      %v1015 = vadd.f32 %v970, 0.0
      %v1016 = vadd.f32 %v902, 0.0
      %v1017 = vadd.f32 %v971, 0.0
      %v1018 = vadd.f32 %v905, 0.0
      %v1019 = vadd.f32 %v972, 0.0
      %v1020 = vadd.f32 %v908, 0.0
      %vm1053 = vcmask 1046528
      %v1054 = vrot.slane %v957, 1
      %v1055 = vrot.slane %v863, 1
      %v1056 = vsel %vm1053, %v1054, %v1055
      %v1057 = vrot.slane %v973, 1
      %v1058 = vsel %vm1053, %v1055, %v1057
      %v1059 = vrot.slane %v958, 1
      %v1060 = vrot.slane %v866, 1
      %v1061 = vsel %vm1053, %v1059, %v1060
      %v1062 = vrot.slane %v974, 1
      %v1063 = vsel %vm1053, %v1060, %v1062
      %v1064 = vrot.slane %v959, 1
      %v1065 = vrot.slane %v869, 1
      %v1066 = vsel %vm1053, %v1064, %v1065
      %v1067 = vrot.slane %v975, 1
      %v1068 = vsel %vm1053, %v1065, %v1067
      %v1069 = vrot.slane %v960, 1
      %v1070 = vrot.slane %v872, 1
      %v1071 = vsel %vm1053, %v1069, %v1070
      %v1072 = vrot.slane %v976, 1
      %v1073 = vsel %vm1053, %v1070, %v1072
      %v1074 = vrot.slane %v961, 1
      %v1075 = vrot.slane %v875, 1
      %v1076 = vsel %vm1053, %v1074, %v1075
      %v1077 = vrot.slane %v977, 1
      %v1078 = vsel %vm1053, %v1075, %v1077
      %v1079 = vrot.slane %v962, 1
      %v1080 = vrot.slane %v878, 1
      %v1081 = vsel %vm1053, %v1079, %v1080
      %v1082 = vrot.slane %v978, 1
      %v1083 = vsel %vm1053, %v1080, %v1082
      %v1084 = vrot.slane %v963, 1
      %v1085 = vrot.slane %v881, 1
      %v1086 = vsel %vm1053, %v1084, %v1085
      %v1087 = vrot.slane %v979, 1
      %v1088 = vsel %vm1053, %v1085, %v1087
      %v1089 = vrot.slane %v964, 1
      %v1090 = vrot.slane %v884, 1
      %v1091 = vsel %vm1053, %v1089, %v1090
      %v1092 = vrot.slane %v980, 1
      %v1093 = vsel %vm1053, %v1090, %v1092
      %v1094 = vrot.slane %v965, 1
      %v1095 = vrot.slane %v887, 1
      %v1096 = vsel %vm1053, %v1094, %v1095
      %v1097 = vrot.slane %v981, 1
      %v1098 = vsel %vm1053, %v1095, %v1097
      %v1099 = vrot.slane %v966, 1
      %v1100 = vrot.slane %v890, 1
      %v1101 = vsel %vm1053, %v1099, %v1100
      %v1102 = vrot.slane %v982, 1
      %v1103 = vsel %vm1053, %v1100, %v1102
      %v1104 = vrot.slane %v967, 1
      %v1105 = vrot.slane %v893, 1
      %v1106 = vsel %vm1053, %v1104, %v1105
      %v1107 = vrot.slane %v983, 1
      %v1108 = vsel %vm1053, %v1105, %v1107
      %v1109 = vrot.slane %v968, 1
      %v1110 = vrot.slane %v896, 1
      %v1111 = vsel %vm1053, %v1109, %v1110
      %v1112 = vrot.slane %v984, 1
      %v1113 = vsel %vm1053, %v1110, %v1112
      %v1114 = vrot.slane %v969, 1
      %v1115 = vrot.slane %v899, 1
      %v1116 = vsel %vm1053, %v1114, %v1115
      %v1117 = vrot.slane %v985, 1
      %v1118 = vsel %vm1053, %v1115, %v1117
      %v1119 = vrot.slane %v970, 1
      %v1120 = vrot.slane %v902, 1
      %v1121 = vsel %vm1053, %v1119, %v1120
      %v1122 = vrot.slane %v986, 1
      %v1123 = vsel %vm1053, %v1120, %v1122
      %v1124 = vrot.slane %v971, 1
      %v1125 = vrot.slane %v905, 1
      %v1126 = vsel %vm1053, %v1124, %v1125
      %v1127 = vrot.slane %v987, 1
      %v1128 = vsel %vm1053, %v1125, %v1127
      %v1129 = vrot.slane %v972, 1
      %v1130 = vrot.slane %v908, 1
      %v1131 = vsel %vm1053, %v1129, %v1130
      %v1132 = vrot.slane %v988, 1
      %v1133 = vsel %vm1053, %v1130, %v1132
      %1134 = vrot.lane.b32.xlu0 %v1056, 127
      %v1135 = vpop.permute.xlu0 %1134
      %1136 = vrot.lane.b32.xlu0 %v1058, 127
      %v1137 = vpop.permute.xlu0 %1136
      %1138 = vrot.lane.b32.xlu0 %v1061, 127
      %v1139 = vpop.permute.xlu0 %1138
      %1140 = vrot.lane.b32.xlu0 %v1063, 127
      %v1141 = vpop.permute.xlu0 %1140
      %1142 = vrot.lane.b32.xlu0 %v1066, 127
      %v1143 = vpop.permute.xlu0 %1142
      %1144 = vrot.lane.b32.xlu0 %v1068, 127
      %v1145 = vpop.permute.xlu0 %1144
      %1146 = vrot.lane.b32.xlu0 %v1071, 127
      %v1147 = vpop.permute.xlu0 %1146
      %1148 = vrot.lane.b32.xlu0 %v1073, 127
      %v1149 = vpop.permute.xlu0 %1148
      %1150 = vrot.lane.b32.xlu0 %v1076, 127
      %v1151 = vpop.permute.xlu0 %1150
      %1152 = vrot.lane.b32.xlu0 %v1078, 127
      %v1153 = vpop.permute.xlu0 %1152
      %1154 = vrot.lane.b32.xlu0 %v1081, 127
      %v1155 = vpop.permute.xlu0 %1154
      %1156 = vrot.lane.b32.xlu0 %v1083, 127
      %v1157 = vpop.permute.xlu0 %1156
      %1158 = vrot.lane.b32.xlu0 %v1086, 127
      %v1159 = vpop.permute.xlu0 %1158
      %1160 = vrot.lane.b32.xlu0 %v1088, 127
      %v1161 = vpop.permute.xlu0 %1160
      %1162 = vrot.lane.b32.xlu0 %v1091, 127
      %v1163 = vpop.permute.xlu0 %1162
      %1164 = vrot.lane.b32.xlu0 %v1093, 127
      %v1165 = vpop.permute.xlu0 %1164
      %1166 = vrot.lane.b32.xlu0 %v1096, 127
      %v1167 = vpop.permute.xlu0 %1166
      %1168 = vrot.lane.b32.xlu0 %v1098, 127
      %v1169 = vpop.permute.xlu0 %1168
      %1170 = vrot.lane.b32.xlu0 %v1101, 127
      %v1171 = vpop.permute.xlu0 %1170
      %1172 = vrot.lane.b32.xlu0 %v1103, 127
      %v1173 = vpop.permute.xlu0 %1172
      %1174 = vrot.lane.b32.xlu0 %v1106, 127
      %v1175 = vpop.permute.xlu0 %1174
      %1176 = vrot.lane.b32.xlu0 %v1108, 127
      %v1177 = vpop.permute.xlu0 %1176
      %1178 = vrot.lane.b32.xlu0 %v1111, 127
      %v1179 = vpop.permute.xlu0 %1178
      %1180 = vrot.lane.b32.xlu0 %v1113, 127
      %v1181 = vpop.permute.xlu0 %1180
      %1182 = vrot.lane.b32.xlu0 %v1116, 127
      %v1183 = vpop.permute.xlu0 %1182
      %1184 = vrot.lane.b32.xlu0 %v1118, 127
      %v1185 = vpop.permute.xlu0 %1184
      %1186 = vrot.lane.b32.xlu0 %v1121, 127
      %v1187 = vpop.permute.xlu0 %1186
      %1188 = vrot.lane.b32.xlu0 %v1123, 127
      %v1189 = vpop.permute.xlu0 %1188
      %1190 = vrot.lane.b32.xlu0 %v1126, 127
      %v1191 = vpop.permute.xlu0 %1190
      %1192 = vrot.lane.b32.xlu0 %v1128, 127
      %v1193 = vpop.permute.xlu0 %1192
      %1194 = vrot.lane.b32.xlu0 %v1131, 127
      %v1195 = vpop.permute.xlu0 %1194
      %1196 = vrot.lane.b32.xlu0 %v1133, 127
      %v1197 = vpop.permute.xlu0 %1196
      %v1230 = vadd.f32 %v989, %v1135
      %v1231 = vadd.f32 %v990, %v1137
      %v1232 = vadd.f32 %v991, %v1139
      %v1233 = vadd.f32 %v992, %v1141
      %v1234 = vadd.f32 %v993, %v1143
      %v1235 = vadd.f32 %v994, %v1145
      %v1236 = vadd.f32 %v995, %v1147
      %v1237 = vadd.f32 %v996, %v1149
      %v1238 = vadd.f32 %v997, %v1151
      %v1239 = vadd.f32 %v998, %v1153
      %v1240 = vadd.f32 %v999, %v1155
      %v1241 = vadd.f32 %v1000, %v1157
      %v1242 = vadd.f32 %v1001, %v1159
      %v1243 = vadd.f32 %v1002, %v1161
      %v1244 = vadd.f32 %v1003, %v1163
      %v1245 = vadd.f32 %v1004, %v1165
      %v1246 = vadd.f32 %v1005, %v1167
      %v1247 = vadd.f32 %v1006, %v1169
      %v1248 = vadd.f32 %v1007, %v1171
      %v1249 = vadd.f32 %v1008, %v1173
      %v1250 = vadd.f32 %v1009, %v1175
      %v1251 = vadd.f32 %v1010, %v1177
      %v1252 = vadd.f32 %v1011, %v1179
      %v1253 = vadd.f32 %v1012, %v1181
      %v1254 = vadd.f32 %v1013, %v1183
      %v1255 = vadd.f32 %v1014, %v1185
      %v1256 = vadd.f32 %v1015, %v1187
      %v1257 = vadd.f32 %v1016, %v1189
      %v1258 = vadd.f32 %v1017, %v1191
      %v1259 = vadd.f32 %v1018, %v1193
      %v1260 = vadd.f32 %v1019, %v1195
      %v1261 = vadd.f32 %v1020, %v1197
      %vm1262 = vcmask 1045504
      %v1263 = vrot.slane %v957, 2
      %v1264 = vrot.slane %v863, 2
      %v1265 = vsel %vm1262, %v1263, %v1264
      %v1266 = vrot.slane %v973, 2
      %v1267 = vsel %vm1262, %v1264, %v1266
      %v1268 = vrot.slane %v958, 2
      %v1269 = vrot.slane %v866, 2
      %v1270 = vsel %vm1262, %v1268, %v1269
      %v1271 = vrot.slane %v974, 2
      %v1272 = vsel %vm1262, %v1269, %v1271
      %v1273 = vrot.slane %v959, 2
      %v1274 = vrot.slane %v869, 2
      %v1275 = vsel %vm1262, %v1273, %v1274
      %v1276 = vrot.slane %v975, 2
      %v1277 = vsel %vm1262, %v1274, %v1276
      %v1278 = vrot.slane %v960, 2
      %v1279 = vrot.slane %v872, 2
      %v1280 = vsel %vm1262, %v1278, %v1279
      %v1281 = vrot.slane %v976, 2
      %v1282 = vsel %vm1262, %v1279, %v1281
      %v1283 = vrot.slane %v961, 2
      %v1284 = vrot.slane %v875, 2
      %v1285 = vsel %vm1262, %v1283, %v1284
      %v1286 = vrot.slane %v977, 2
      %v1287 = vsel %vm1262, %v1284, %v1286
      %v1288 = vrot.slane %v962, 2
      %v1289 = vrot.slane %v878, 2
      %v1290 = vsel %vm1262, %v1288, %v1289
      %v1291 = vrot.slane %v978, 2
      %v1292 = vsel %vm1262, %v1289, %v1291
      %v1293 = vrot.slane %v963, 2
      %v1294 = vrot.slane %v881, 2
      %v1295 = vsel %vm1262, %v1293, %v1294
      %v1296 = vrot.slane %v979, 2
      %v1297 = vsel %vm1262, %v1294, %v1296
      %v1298 = vrot.slane %v964, 2
      %v1299 = vrot.slane %v884, 2
      %v1300 = vsel %vm1262, %v1298, %v1299
      %v1301 = vrot.slane %v980, 2
      %v1302 = vsel %vm1262, %v1299, %v1301
      %v1303 = vrot.slane %v965, 2
      %v1304 = vrot.slane %v887, 2
      %v1305 = vsel %vm1262, %v1303, %v1304
      %v1306 = vrot.slane %v981, 2
      %v1307 = vsel %vm1262, %v1304, %v1306
      %v1308 = vrot.slane %v966, 2
      %v1309 = vrot.slane %v890, 2
      %v1310 = vsel %vm1262, %v1308, %v1309
      %v1311 = vrot.slane %v982, 2
      %v1312 = vsel %vm1262, %v1309, %v1311
      %v1313 = vrot.slane %v967, 2
      %v1314 = vrot.slane %v893, 2
      %v1315 = vsel %vm1262, %v1313, %v1314
      %v1316 = vrot.slane %v983, 2
      %v1317 = vsel %vm1262, %v1314, %v1316
      %v1318 = vrot.slane %v968, 2
      %v1319 = vrot.slane %v896, 2
      %v1320 = vsel %vm1262, %v1318, %v1319
      %v1321 = vrot.slane %v984, 2
      %v1322 = vsel %vm1262, %v1319, %v1321
      %v1323 = vrot.slane %v969, 2
      %v1324 = vrot.slane %v899, 2
      %v1325 = vsel %vm1262, %v1323, %v1324
      %v1326 = vrot.slane %v985, 2
      %v1327 = vsel %vm1262, %v1324, %v1326
      %v1328 = vrot.slane %v970, 2
      %v1329 = vrot.slane %v902, 2
      %v1330 = vsel %vm1262, %v1328, %v1329
      %v1331 = vrot.slane %v986, 2
      %v1332 = vsel %vm1262, %v1329, %v1331
      %v1333 = vrot.slane %v971, 2
      %v1334 = vrot.slane %v905, 2
      %v1335 = vsel %vm1262, %v1333, %v1334
      %v1336 = vrot.slane %v987, 2
      %v1337 = vsel %vm1262, %v1334, %v1336
      %v1338 = vrot.slane %v972, 2
      %v1339 = vrot.slane %v908, 2
      %v1340 = vsel %vm1262, %v1338, %v1339
      %v1341 = vrot.slane %v988, 2
      %v1342 = vsel %vm1262, %v1339, %v1341
      %1343 = vrot.lane.b32.xlu0 %v1265, 126
      %v1344 = vpop.permute.xlu0 %1343
      %1345 = vrot.lane.b32.xlu0 %v1267, 126
      %v1346 = vpop.permute.xlu0 %1345
      %1347 = vrot.lane.b32.xlu0 %v1270, 126
      %v1348 = vpop.permute.xlu0 %1347
      %1349 = vrot.lane.b32.xlu0 %v1272, 126
      %v1350 = vpop.permute.xlu0 %1349
      %1351 = vrot.lane.b32.xlu0 %v1275, 126
      %v1352 = vpop.permute.xlu0 %1351
      %1353 = vrot.lane.b32.xlu0 %v1277, 126
      %v1354 = vpop.permute.xlu0 %1353
      %1355 = vrot.lane.b32.xlu0 %v1280, 126
      %v1356 = vpop.permute.xlu0 %1355
      %1357 = vrot.lane.b32.xlu0 %v1282, 126
      %v1358 = vpop.permute.xlu0 %1357
      %1359 = vrot.lane.b32.xlu0 %v1285, 126
      %v1360 = vpop.permute.xlu0 %1359
      %1361 = vrot.lane.b32.xlu0 %v1287, 126
      %v1362 = vpop.permute.xlu0 %1361
      %1363 = vrot.lane.b32.xlu0 %v1290, 126
      %v1364 = vpop.permute.xlu0 %1363
      %1365 = vrot.lane.b32.xlu0 %v1292, 126
      %v1366 = vpop.permute.xlu0 %1365
      %1367 = vrot.lane.b32.xlu0 %v1295, 126
      %v1368 = vpop.permute.xlu0 %1367
      %1369 = vrot.lane.b32.xlu0 %v1297, 126
      %v1370 = vpop.permute.xlu0 %1369
      %1371 = vrot.lane.b32.xlu0 %v1300, 126
      %v1372 = vpop.permute.xlu0 %1371
      %1373 = vrot.lane.b32.xlu0 %v1302, 126
      %v1374 = vpop.permute.xlu0 %1373
      %1375 = vrot.lane.b32.xlu0 %v1305, 126
      %v1376 = vpop.permute.xlu0 %1375
      %1377 = vrot.lane.b32.xlu0 %v1307, 126
      %v1378 = vpop.permute.xlu0 %1377
      %1379 = vrot.lane.b32.xlu0 %v1310, 126
      %v1380 = vpop.permute.xlu0 %1379
      %1381 = vrot.lane.b32.xlu0 %v1312, 126
      %v1382 = vpop.permute.xlu0 %1381
      %1383 = vrot.lane.b32.xlu0 %v1315, 126
      %v1384 = vpop.permute.xlu0 %1383
      %1385 = vrot.lane.b32.xlu0 %v1317, 126
      %v1386 = vpop.permute.xlu0 %1385
      %1387 = vrot.lane.b32.xlu0 %v1320, 126
      %v1388 = vpop.permute.xlu0 %1387
      %1389 = vrot.lane.b32.xlu0 %v1322, 126
      %v1390 = vpop.permute.xlu0 %1389
      %1391 = vrot.lane.b32.xlu0 %v1325, 126
      %v1392 = vpop.permute.xlu0 %1391
      %1393 = vrot.lane.b32.xlu0 %v1327, 126
      %v1394 = vpop.permute.xlu0 %1393
      %1395 = vrot.lane.b32.xlu0 %v1330, 126
      %v1396 = vpop.permute.xlu0 %1395
      %1397 = vrot.lane.b32.xlu0 %v1332, 126
      %v1398 = vpop.permute.xlu0 %1397
      %1399 = vrot.lane.b32.xlu0 %v1335, 126
      %v1400 = vpop.permute.xlu0 %1399
      %1401 = vrot.lane.b32.xlu0 %v1337, 126
      %v1402 = vpop.permute.xlu0 %1401
      %1403 = vrot.lane.b32.xlu0 %v1340, 126
      %v1404 = vpop.permute.xlu0 %1403
      %1405 = vrot.lane.b32.xlu0 %v1342, 126
      %v1406 = vpop.permute.xlu0 %1405
      %v1439 = vadd.f32 %v1230, %v1344
      %v1440 = vadd.f32 %v1231, %v1346
      %v1441 = vadd.f32 %v1232, %v1348
      %v1442 = vadd.f32 %v1233, %v1350
      %v1443 = vadd.f32 %v1234, %v1352
      %v1444 = vadd.f32 %v1235, %v1354
      %v1445 = vadd.f32 %v1236, %v1356
      %v1446 = vadd.f32 %v1237, %v1358
      %v1447 = vadd.f32 %v1238, %v1360
      %v1448 = vadd.f32 %v1239, %v1362
      %v1449 = vadd.f32 %v1240, %v1364
      %v1450 = vadd.f32 %v1241, %v1366
      %v1451 = vadd.f32 %v1242, %v1368
      %v1452 = vadd.f32 %v1243, %v1370
      %v1453 = vadd.f32 %v1244, %v1372
      %v1454 = vadd.f32 %v1245, %v1374
      %v1455 = vadd.f32 %v1246, %v1376
      %v1456 = vadd.f32 %v1247, %v1378
      %v1457 = vadd.f32 %v1248, %v1380
      %v1458 = vadd.f32 %v1249, %v1382
      %v1459 = vadd.f32 %v1250, %v1384
      %v1460 = vadd.f32 %v1251, %v1386
      %v1461 = vadd.f32 %v1252, %v1388
      %v1462 = vadd.f32 %v1253, %v1390
      %v1463 = vadd.f32 %v1254, %v1392
      %v1464 = vadd.f32 %v1255, %v1394
      %v1465 = vadd.f32 %v1256, %v1396
      %v1466 = vadd.f32 %v1257, %v1398
      %v1467 = vadd.f32 %v1258, %v1400
      %v1468 = vadd.f32 %v1259, %v1402
      %v1469 = vadd.f32 %v1260, %v1404
      %v1470 = vadd.f32 %v1261, %v1406
      %s1471 = sld [smem:[#allocation2]]
      %v1472 = vstv %s1471
      %v1473 = vadd.f32 %v1439, %v1472
      %v1474 = vadd.f32 %v1440, %v1472
      %v1475 = vadd.f32 %v1441, %v1472
      %v1476 = vadd.f32 %v1442, %v1472
      %v1477 = vadd.f32 %v1443, %v1472
      %v1478 = vadd.f32 %v1444, %v1472
      %v1479 = vadd.f32 %v1445, %v1472
      %v1480 = vadd.f32 %v1446, %v1472
      %v1481 = vadd.f32 %v1447, %v1472
      %v1482 = vadd.f32 %v1448, %v1472
      %v1483 = vadd.f32 %v1449, %v1472
      %v1484 = vadd.f32 %v1450, %v1472
      %v1485 = vadd.f32 %v1451, %v1472
      %v1486 = vadd.f32 %v1452, %v1472
      %v1487 = vadd.f32 %v1453, %v1472
      %v1488 = vadd.f32 %v1454, %v1472
      %v1489 = vadd.f32 %v1455, %v1472
      %v1490 = vadd.f32 %v1456, %v1472
      %v1491 = vadd.f32 %v1457, %v1472
      %v1492 = vadd.f32 %v1458, %v1472
      %v1493 = vadd.f32 %v1459, %v1472
      %v1494 = vadd.f32 %v1460, %v1472
      %v1495 = vadd.f32 %v1461, %v1472
      %v1496 = vadd.f32 %v1462, %v1472
      %v1497 = vadd.f32 %v1463, %v1472
      %v1498 = vadd.f32 %v1464, %v1472
      %v1499 = vadd.f32 %v1465, %v1472
      %v1500 = vadd.f32 %v1466, %v1472
      %v1501 = vadd.f32 %v1467, %v1472
      %v1502 = vadd.f32 %v1468, %v1472
      %v1503 = vadd.f32 %v1469, %v1472
      %v1504 = vadd.f32 %v1470, %v1472
      %v1505 = vxor.u32 %v1473, 2147483648
      %v1506 = vxor.u32 %v1474, 2147483648
      %v1507 = vxor.u32 %v1475, 2147483648
      %v1508 = vxor.u32 %v1476, 2147483648
      %v1509 = vxor.u32 %v1477, 2147483648
      %v1510 = vxor.u32 %v1478, 2147483648
      %v1511 = vxor.u32 %v1479, 2147483648
      %v1512 = vxor.u32 %v1480, 2147483648
      %v1513 = vxor.u32 %v1481, 2147483648
      %v1514 = vxor.u32 %v1482, 2147483648
      %v1515 = vxor.u32 %v1483, 2147483648
      %v1516 = vxor.u32 %v1484, 2147483648
      %v1517 = vxor.u32 %v1485, 2147483648
      %v1518 = vxor.u32 %v1486, 2147483648
      %v1519 = vxor.u32 %v1487, 2147483648
      %v1520 = vxor.u32 %v1488, 2147483648
      %v1521 = vxor.u32 %v1489, 2147483648
      %v1522 = vxor.u32 %v1490, 2147483648
      %v1523 = vxor.u32 %v1491, 2147483648
      %v1524 = vxor.u32 %v1492, 2147483648
      %v1525 = vxor.u32 %v1493, 2147483648
      %v1526 = vxor.u32 %v1494, 2147483648
      %v1527 = vxor.u32 %v1495, 2147483648
      %v1528 = vxor.u32 %v1496, 2147483648
      %v1529 = vxor.u32 %v1497, 2147483648
      %v1530 = vxor.u32 %v1498, 2147483648
      %v1531 = vxor.u32 %v1499, 2147483648
      %v1532 = vxor.u32 %v1500, 2147483648
      %v1533 = vxor.u32 %v1501, 2147483648
      %v1534 = vxor.u32 %v1502, 2147483648
      %v1535 = vxor.u32 %v1503, 2147483648
      %v1536 = vxor.u32 %v1504, 2147483648
      %v1537 = vmul.f32 %v1505, 1.442695
      %v1538 = vpow.pop %v1537
      %v1539 = vmul.f32 %v1506, 1.442695
      %v1540 = vpow.pop %v1539
      %v1541 = vmul.f32 %v1507, 1.442695
      %v1542 = vpow.pop %v1541
      %v1543 = vmul.f32 %v1508, 1.442695
      %v1544 = vpow.pop %v1543
      %v1545 = vmul.f32 %v1509, 1.442695
      %v1546 = vpow.pop %v1545
      %v1547 = vmul.f32 %v1510, 1.442695
      %v1548 = vpow.pop %v1547
      %v1549 = vmul.f32 %v1511, 1.442695
      %v1550 = vpow.pop %v1549
      %v1551 = vmul.f32 %v1512, 1.442695
      %v1552 = vpow.pop %v1551
      %v1553 = vmul.f32 %v1513, 1.442695
      %v1554 = vpow.pop %v1553
      %v1555 = vmul.f32 %v1514, 1.442695
      %v1556 = vpow.pop %v1555
      %v1557 = vmul.f32 %v1515, 1.442695
      %v1558 = vpow.pop %v1557
      %v1559 = vmul.f32 %v1516, 1.442695
      %v1560 = vpow.pop %v1559
      %v1561 = vmul.f32 %v1517, 1.442695
      %v1562 = vpow.pop %v1561
      %v1563 = vmul.f32 %v1518, 1.442695
      %v1564 = vpow.pop %v1563
      %v1565 = vmul.f32 %v1519, 1.442695
      %v1566 = vpow.pop %v1565
      %v1567 = vmul.f32 %v1520, 1.442695
      %v1568 = vpow.pop %v1567
      %v1569 = vmul.f32 %v1521, 1.442695
      %v1570 = vpow.pop %v1569
      %v1571 = vmul.f32 %v1522, 1.442695
      %v1572 = vpow.pop %v1571
      %v1573 = vmul.f32 %v1523, 1.442695
      %v1574 = vpow.pop %v1573
      %v1575 = vmul.f32 %v1524, 1.442695
      %v1576 = vpow.pop %v1575
      %v1577 = vmul.f32 %v1525, 1.442695
      %v1578 = vpow.pop %v1577
      %v1579 = vmul.f32 %v1526, 1.442695
      %v1580 = vpow.pop %v1579
      %v1581 = vmul.f32 %v1527, 1.442695
      %v1582 = vpow.pop %v1581
      %v1583 = vmul.f32 %v1528, 1.442695
      %v1584 = vpow.pop %v1583
      %v1585 = vmul.f32 %v1529, 1.442695
      %v1586 = vpow.pop %v1585
      %v1587 = vmul.f32 %v1530, 1.442695
      %v1588 = vpow.pop %v1587
      %v1589 = vmul.f32 %v1531, 1.442695
      %v1590 = vpow.pop %v1589
      %v1591 = vmul.f32 %v1532, 1.442695
      %v1592 = vpow.pop %v1591
      %v1593 = vmul.f32 %v1533, 1.442695
      %v1594 = vpow.pop %v1593
      %v1595 = vmul.f32 %v1534, 1.442695
      %v1596 = vpow.pop %v1595
      %v1597 = vmul.f32 %v1535, 1.442695
      %v1598 = vpow.pop %v1597
      %v1599 = vmul.f32 %v1536, 1.442695
      %v1600 = vpow.pop %v1599
      %v1601 = vadd.f32 %v1538, 1.0
      %v1602 = vadd.f32 %v1540, 1.0
      %v1603 = vadd.f32 %v1542, 1.0
      %v1604 = vadd.f32 %v1544, 1.0
      %v1605 = vadd.f32 %v1546, 1.0
      %v1606 = vadd.f32 %v1548, 1.0
      %v1607 = vadd.f32 %v1550, 1.0
      %v1608 = vadd.f32 %v1552, 1.0
      %v1609 = vadd.f32 %v1554, 1.0
      %v1610 = vadd.f32 %v1556, 1.0
      %v1611 = vadd.f32 %v1558, 1.0
      %v1612 = vadd.f32 %v1560, 1.0
      %v1613 = vadd.f32 %v1562, 1.0
      %v1614 = vadd.f32 %v1564, 1.0
      %v1615 = vadd.f32 %v1566, 1.0
      %v1616 = vadd.f32 %v1568, 1.0
      %v1617 = vadd.f32 %v1570, 1.0
      %v1618 = vadd.f32 %v1572, 1.0
      %v1619 = vadd.f32 %v1574, 1.0
      %v1620 = vadd.f32 %v1576, 1.0
      %v1621 = vadd.f32 %v1578, 1.0
      %v1622 = vadd.f32 %v1580, 1.0
      %v1623 = vadd.f32 %v1582, 1.0
      %v1624 = vadd.f32 %v1584, 1.0
      %v1625 = vadd.f32 %v1586, 1.0
      %v1626 = vadd.f32 %v1588, 1.0
      %v1627 = vadd.f32 %v1590, 1.0
      %v1628 = vadd.f32 %v1592, 1.0
      %v1629 = vadd.f32 %v1594, 1.0
      %v1630 = vadd.f32 %v1596, 1.0
      %v1631 = vadd.f32 %v1598, 1.0
      %v1632 = vadd.f32 %v1600, 1.0
      %v1633 = vrcp.pop %v1601
      %v1634 = vmul.f32 %v1601, %v1633
      %v1635 = vsub.f32 1.0, %v1634
      %v1636 = vmul.f32 %v1633, %v1635
      %v1637 = vadd.f32 %v1633, %v1636
      %vm1638 = vweird.f32 %v1601
      %vm1639 = vweird.f32 %v1633
      %vm1640 = vmor %vm1638, %vm1639
      %v1641 = vsel %vm1640, %v1633, %v1637
      %v1642 = vand.u32 2147483647, %v1601
      %vm1643 = vcmp.eq.f32.partialorder %v1642, 8.507059e+37
      %v1644 = vand.u32 %v1601, 2147483648
      %v1645 = vor.u32 1.1754944e-38, %v1644
      %v1646 = vsel %vm1643, %v1645, %v1641
      %v1647 = vmul.f32 1.0, %v1646
      %v1648 = vrcp.pop %v1602
      %v1649 = vmul.f32 %v1602, %v1648
      %v1650 = vsub.f32 1.0, %v1649
      %v1651 = vmul.f32 %v1648, %v1650
      %v1652 = vadd.f32 %v1648, %v1651
      %vm1653 = vweird.f32 %v1602
      %vm1654 = vweird.f32 %v1648
      %vm1655 = vmor %vm1653, %vm1654
      %v1656 = vsel %vm1655, %v1648, %v1652
      %v1657 = vand.u32 2147483647, %v1602
      %vm1658 = vcmp.eq.f32.partialorder %v1657, 8.507059e+37
      %v1659 = vand.u32 %v1602, 2147483648
      %v1660 = vor.u32 1.1754944e-38, %v1659
      %v1661 = vsel %vm1658, %v1660, %v1656
      %v1662 = vmul.f32 1.0, %v1661
      %v1663 = vrcp.pop %v1603
      %v1664 = vmul.f32 %v1603, %v1663
      %v1665 = vsub.f32 1.0, %v1664
      %v1666 = vmul.f32 %v1663, %v1665
      %v1667 = vadd.f32 %v1663, %v1666
      %vm1668 = vweird.f32 %v1603
      %vm1669 = vweird.f32 %v1663
      %vm1670 = vmor %vm1668, %vm1669
      %v1671 = vsel %vm1670, %v1663, %v1667
      %v1672 = vand.u32 2147483647, %v1603
      %vm1673 = vcmp.eq.f32.partialorder %v1672, 8.507059e+37
      %v1674 = vand.u32 %v1603, 2147483648
      %v1675 = vor.u32 1.1754944e-38, %v1674
      %v1676 = vsel %vm1673, %v1675, %v1671
      %v1677 = vmul.f32 1.0, %v1676
      %v1678 = vrcp.pop %v1604
      %v1679 = vmul.f32 %v1604, %v1678
      %v1680 = vsub.f32 1.0, %v1679
      %v1681 = vmul.f32 %v1678, %v1680
      %v1682 = vadd.f32 %v1678, %v1681
      %vm1683 = vweird.f32 %v1604
      %vm1684 = vweird.f32 %v1678
      %vm1685 = vmor %vm1683, %vm1684
      %v1686 = vsel %vm1685, %v1678, %v1682
      %v1687 = vand.u32 2147483647, %v1604
      %vm1688 = vcmp.eq.f32.partialorder %v1687, 8.507059e+37
      %v1689 = vand.u32 %v1604, 2147483648
      %v1690 = vor.u32 1.1754944e-38, %v1689
      %v1691 = vsel %vm1688, %v1690, %v1686
      %v1692 = vmul.f32 1.0, %v1691
      %v1693 = vrcp.pop %v1605
      %v1694 = vmul.f32 %v1605, %v1693
      %v1695 = vsub.f32 1.0, %v1694
      %v1696 = vmul.f32 %v1693, %v1695
      %v1697 = vadd.f32 %v1693, %v1696
      %vm1698 = vweird.f32 %v1605
      %vm1699 = vweird.f32 %v1693
      %vm1700 = vmor %vm1698, %vm1699
      %v1701 = vsel %vm1700, %v1693, %v1697
      %v1702 = vand.u32 2147483647, %v1605
      %vm1703 = vcmp.eq.f32.partialorder %v1702, 8.507059e+37
      %v1704 = vand.u32 %v1605, 2147483648
      %v1705 = vor.u32 1.1754944e-38, %v1704
      %v1706 = vsel %vm1703, %v1705, %v1701
      %v1707 = vmul.f32 1.0, %v1706
      %v1708 = vrcp.pop %v1606
      %v1709 = vmul.f32 %v1606, %v1708
      %v1710 = vsub.f32 1.0, %v1709
      %v1711 = vmul.f32 %v1708, %v1710
      %v1712 = vadd.f32 %v1708, %v1711
      %vm1713 = vweird.f32 %v1606
      %vm1714 = vweird.f32 %v1708
      %vm1715 = vmor %vm1713, %vm1714
      %v1716 = vsel %vm1715, %v1708, %v1712
      %v1717 = vand.u32 2147483647, %v1606
      %vm1718 = vcmp.eq.f32.partialorder %v1717, 8.507059e+37
      %v1719 = vand.u32 %v1606, 2147483648
      %v1720 = vor.u32 1.1754944e-38, %v1719
      %v1721 = vsel %vm1718, %v1720, %v1716
      %v1722 = vmul.f32 1.0, %v1721
      %v1723 = vrcp.pop %v1607
      %v1724 = vmul.f32 %v1607, %v1723
      %v1725 = vsub.f32 1.0, %v1724
      %v1726 = vmul.f32 %v1723, %v1725
      %v1727 = vadd.f32 %v1723, %v1726
      %vm1728 = vweird.f32 %v1607
      %vm1729 = vweird.f32 %v1723
      %vm1730 = vmor %vm1728, %vm1729
      %v1731 = vsel %vm1730, %v1723, %v1727
      %v1732 = vand.u32 2147483647, %v1607
      %vm1733 = vcmp.eq.f32.partialorder %v1732, 8.507059e+37
      %v1734 = vand.u32 %v1607, 2147483648
      %v1735 = vor.u32 1.1754944e-38, %v1734
      %v1736 = vsel %vm1733, %v1735, %v1731
      %v1737 = vmul.f32 1.0, %v1736
      %v1738 = vrcp.pop %v1608
      %v1739 = vmul.f32 %v1608, %v1738
      %v1740 = vsub.f32 1.0, %v1739
      %v1741 = vmul.f32 %v1738, %v1740
      %v1742 = vadd.f32 %v1738, %v1741
      %vm1743 = vweird.f32 %v1608
      %vm1744 = vweird.f32 %v1738
      %vm1745 = vmor %vm1743, %vm1744
      %v1746 = vsel %vm1745, %v1738, %v1742
      %v1747 = vand.u32 2147483647, %v1608
      %vm1748 = vcmp.eq.f32.partialorder %v1747, 8.507059e+37
      %v1749 = vand.u32 %v1608, 2147483648
      %v1750 = vor.u32 1.1754944e-38, %v1749
      %v1751 = vsel %vm1748, %v1750, %v1746
      %v1752 = vmul.f32 1.0, %v1751
      %v1753 = vrcp.pop %v1609
      %v1754 = vmul.f32 %v1609, %v1753
      %v1755 = vsub.f32 1.0, %v1754
      %v1756 = vmul.f32 %v1753, %v1755
      %v1757 = vadd.f32 %v1753, %v1756
      %vm1758 = vweird.f32 %v1609
      %vm1759 = vweird.f32 %v1753
      %vm1760 = vmor %vm1758, %vm1759
      %v1761 = vsel %vm1760, %v1753, %v1757
      %v1762 = vand.u32 2147483647, %v1609
      %vm1763 = vcmp.eq.f32.partialorder %v1762, 8.507059e+37
      %v1764 = vand.u32 %v1609, 2147483648
      %v1765 = vor.u32 1.1754944e-38, %v1764
      %v1766 = vsel %vm1763, %v1765, %v1761
      %v1767 = vmul.f32 1.0, %v1766
      %v1768 = vrcp.pop %v1610
      %v1769 = vmul.f32 %v1610, %v1768
      %v1770 = vsub.f32 1.0, %v1769
      %v1771 = vmul.f32 %v1768, %v1770
      %v1772 = vadd.f32 %v1768, %v1771
      %vm1773 = vweird.f32 %v1610
      %vm1774 = vweird.f32 %v1768
      %vm1775 = vmor %vm1773, %vm1774
      %v1776 = vsel %vm1775, %v1768, %v1772
      %v1777 = vand.u32 2147483647, %v1610
      %vm1778 = vcmp.eq.f32.partialorder %v1777, 8.507059e+37
      %v1779 = vand.u32 %v1610, 2147483648
      %v1780 = vor.u32 1.1754944e-38, %v1779
      %v1781 = vsel %vm1778, %v1780, %v1776
      %v1782 = vmul.f32 1.0, %v1781
      %v1783 = vrcp.pop %v1611
      %v1784 = vmul.f32 %v1611, %v1783
      %v1785 = vsub.f32 1.0, %v1784
      %v1786 = vmul.f32 %v1783, %v1785
      %v1787 = vadd.f32 %v1783, %v1786
      %vm1788 = vweird.f32 %v1611
      %vm1789 = vweird.f32 %v1783
      %vm1790 = vmor %vm1788, %vm1789
      %v1791 = vsel %vm1790, %v1783, %v1787
      %v1792 = vand.u32 2147483647, %v1611
      %vm1793 = vcmp.eq.f32.partialorder %v1792, 8.507059e+37
      %v1794 = vand.u32 %v1611, 2147483648
      %v1795 = vor.u32 1.1754944e-38, %v1794
      %v1796 = vsel %vm1793, %v1795, %v1791
      %v1797 = vmul.f32 1.0, %v1796
      %v1798 = vrcp.pop %v1612
      %v1799 = vmul.f32 %v1612, %v1798
      %v1800 = vsub.f32 1.0, %v1799
      %v1801 = vmul.f32 %v1798, %v1800
      %v1802 = vadd.f32 %v1798, %v1801
      %vm1803 = vweird.f32 %v1612
      %vm1804 = vweird.f32 %v1798
      %vm1805 = vmor %vm1803, %vm1804
      %v1806 = vsel %vm1805, %v1798, %v1802
      %v1807 = vand.u32 2147483647, %v1612
      %vm1808 = vcmp.eq.f32.partialorder %v1807, 8.507059e+37
      %v1809 = vand.u32 %v1612, 2147483648
      %v1810 = vor.u32 1.1754944e-38, %v1809
      %v1811 = vsel %vm1808, %v1810, %v1806
      %v1812 = vmul.f32 1.0, %v1811
      %v1813 = vrcp.pop %v1613
      %v1814 = vmul.f32 %v1613, %v1813
      %v1815 = vsub.f32 1.0, %v1814
      %v1816 = vmul.f32 %v1813, %v1815
      %v1817 = vadd.f32 %v1813, %v1816
      %vm1818 = vweird.f32 %v1613
      %vm1819 = vweird.f32 %v1813
      %vm1820 = vmor %vm1818, %vm1819
      %v1821 = vsel %vm1820, %v1813, %v1817
      %v1822 = vand.u32 2147483647, %v1613
      %vm1823 = vcmp.eq.f32.partialorder %v1822, 8.507059e+37
      %v1824 = vand.u32 %v1613, 2147483648
      %v1825 = vor.u32 1.1754944e-38, %v1824
      %v1826 = vsel %vm1823, %v1825, %v1821
      %v1827 = vmul.f32 1.0, %v1826
      %v1828 = vrcp.pop %v1614
      %v1829 = vmul.f32 %v1614, %v1828
      %v1830 = vsub.f32 1.0, %v1829
      %v1831 = vmul.f32 %v1828, %v1830
      %v1832 = vadd.f32 %v1828, %v1831
      %vm1833 = vweird.f32 %v1614
      %vm1834 = vweird.f32 %v1828
      %vm1835 = vmor %vm1833, %vm1834
      %v1836 = vsel %vm1835, %v1828, %v1832
      %v1837 = vand.u32 2147483647, %v1614
      %vm1838 = vcmp.eq.f32.partialorder %v1837, 8.507059e+37
      %v1839 = vand.u32 %v1614, 2147483648
      %v1840 = vor.u32 1.1754944e-38, %v1839
      %v1841 = vsel %vm1838, %v1840, %v1836
      %v1842 = vmul.f32 1.0, %v1841
      %v1843 = vrcp.pop %v1615
      %v1844 = vmul.f32 %v1615, %v1843
      %v1845 = vsub.f32 1.0, %v1844
      %v1846 = vmul.f32 %v1843, %v1845
      %v1847 = vadd.f32 %v1843, %v1846
      %vm1848 = vweird.f32 %v1615
      %vm1849 = vweird.f32 %v1843
      %vm1850 = vmor %vm1848, %vm1849
      %v1851 = vsel %vm1850, %v1843, %v1847
      %v1852 = vand.u32 2147483647, %v1615
      %vm1853 = vcmp.eq.f32.partialorder %v1852, 8.507059e+37
      %v1854 = vand.u32 %v1615, 2147483648
      %v1855 = vor.u32 1.1754944e-38, %v1854
      %v1856 = vsel %vm1853, %v1855, %v1851
      %v1857 = vmul.f32 1.0, %v1856
      %v1858 = vrcp.pop %v1616
      %v1859 = vmul.f32 %v1616, %v1858
      %v1860 = vsub.f32 1.0, %v1859
      %v1861 = vmul.f32 %v1858, %v1860
      %v1862 = vadd.f32 %v1858, %v1861
      %vm1863 = vweird.f32 %v1616
      %vm1864 = vweird.f32 %v1858
      %vm1865 = vmor %vm1863, %vm1864
      %v1866 = vsel %vm1865, %v1858, %v1862
      %v1867 = vand.u32 2147483647, %v1616
      %vm1868 = vcmp.eq.f32.partialorder %v1867, 8.507059e+37
      %v1869 = vand.u32 %v1616, 2147483648
      %v1870 = vor.u32 1.1754944e-38, %v1869
      %v1871 = vsel %vm1868, %v1870, %v1866
      %v1872 = vmul.f32 1.0, %v1871
      %v1873 = vrcp.pop %v1617
      %v1874 = vmul.f32 %v1617, %v1873
      %v1875 = vsub.f32 1.0, %v1874
      %v1876 = vmul.f32 %v1873, %v1875
      %v1877 = vadd.f32 %v1873, %v1876
      %vm1878 = vweird.f32 %v1617
      %vm1879 = vweird.f32 %v1873
      %vm1880 = vmor %vm1878, %vm1879
      %v1881 = vsel %vm1880, %v1873, %v1877
      %v1882 = vand.u32 2147483647, %v1617
      %vm1883 = vcmp.eq.f32.partialorder %v1882, 8.507059e+37
      %v1884 = vand.u32 %v1617, 2147483648
      %v1885 = vor.u32 1.1754944e-38, %v1884
      %v1886 = vsel %vm1883, %v1885, %v1881
      %v1887 = vmul.f32 1.0, %v1886
      %v1888 = vrcp.pop %v1618
      %v1889 = vmul.f32 %v1618, %v1888
      %v1890 = vsub.f32 1.0, %v1889
      %v1891 = vmul.f32 %v1888, %v1890
      %v1892 = vadd.f32 %v1888, %v1891
      %vm1893 = vweird.f32 %v1618
      %vm1894 = vweird.f32 %v1888
      %vm1895 = vmor %vm1893, %vm1894
      %v1896 = vsel %vm1895, %v1888, %v1892
      %v1897 = vand.u32 2147483647, %v1618
      %vm1898 = vcmp.eq.f32.partialorder %v1897, 8.507059e+37
      %v1899 = vand.u32 %v1618, 2147483648
      %v1900 = vor.u32 1.1754944e-38, %v1899
      %v1901 = vsel %vm1898, %v1900, %v1896
      %v1902 = vmul.f32 1.0, %v1901
      %v1903 = vrcp.pop %v1619
      %v1904 = vmul.f32 %v1619, %v1903
      %v1905 = vsub.f32 1.0, %v1904
      %v1906 = vmul.f32 %v1903, %v1905
      %v1907 = vadd.f32 %v1903, %v1906
      %vm1908 = vweird.f32 %v1619
      %vm1909 = vweird.f32 %v1903
      %vm1910 = vmor %vm1908, %vm1909
      %v1911 = vsel %vm1910, %v1903, %v1907
      %v1912 = vand.u32 2147483647, %v1619
      %vm1913 = vcmp.eq.f32.partialorder %v1912, 8.507059e+37
      %v1914 = vand.u32 %v1619, 2147483648
      %v1915 = vor.u32 1.1754944e-38, %v1914
      %v1916 = vsel %vm1913, %v1915, %v1911
      %v1917 = vmul.f32 1.0, %v1916
      %v1918 = vrcp.pop %v1620
      %v1919 = vmul.f32 %v1620, %v1918
      %v1920 = vsub.f32 1.0, %v1919
      %v1921 = vmul.f32 %v1918, %v1920
      %v1922 = vadd.f32 %v1918, %v1921
      %vm1923 = vweird.f32 %v1620
      %vm1924 = vweird.f32 %v1918
      %vm1925 = vmor %vm1923, %vm1924
      %v1926 = vsel %vm1925, %v1918, %v1922
      %v1927 = vand.u32 2147483647, %v1620
      %vm1928 = vcmp.eq.f32.partialorder %v1927, 8.507059e+37
      %v1929 = vand.u32 %v1620, 2147483648
      %v1930 = vor.u32 1.1754944e-38, %v1929
      %v1931 = vsel %vm1928, %v1930, %v1926
      %v1932 = vmul.f32 1.0, %v1931
      %v1933 = vrcp.pop %v1621
      %v1934 = vmul.f32 %v1621, %v1933
      %v1935 = vsub.f32 1.0, %v1934
      %v1936 = vmul.f32 %v1933, %v1935
      %v1937 = vadd.f32 %v1933, %v1936
      %vm1938 = vweird.f32 %v1621
      %vm1939 = vweird.f32 %v1933
      %vm1940 = vmor %vm1938, %vm1939
      %v1941 = vsel %vm1940, %v1933, %v1937
      %v1942 = vand.u32 2147483647, %v1621
      %vm1943 = vcmp.eq.f32.partialorder %v1942, 8.507059e+37
      %v1944 = vand.u32 %v1621, 2147483648
      %v1945 = vor.u32 1.1754944e-38, %v1944
      %v1946 = vsel %vm1943, %v1945, %v1941
      %v1947 = vmul.f32 1.0, %v1946
      %v1948 = vrcp.pop %v1622
      %v1949 = vmul.f32 %v1622, %v1948
      %v1950 = vsub.f32 1.0, %v1949
      %v1951 = vmul.f32 %v1948, %v1950
      %v1952 = vadd.f32 %v1948, %v1951
      %vm1953 = vweird.f32 %v1622
      %vm1954 = vweird.f32 %v1948
      %vm1955 = vmor %vm1953, %vm1954
      %v1956 = vsel %vm1955, %v1948, %v1952
      %v1957 = vand.u32 2147483647, %v1622
      %vm1958 = vcmp.eq.f32.partialorder %v1957, 8.507059e+37
      %v1959 = vand.u32 %v1622, 2147483648
      %v1960 = vor.u32 1.1754944e-38, %v1959
      %v1961 = vsel %vm1958, %v1960, %v1956
      %v1962 = vmul.f32 1.0, %v1961
      %v1963 = vrcp.pop %v1623
      %v1964 = vmul.f32 %v1623, %v1963
      %v1965 = vsub.f32 1.0, %v1964
      %v1966 = vmul.f32 %v1963, %v1965
      %v1967 = vadd.f32 %v1963, %v1966
      %vm1968 = vweird.f32 %v1623
      %vm1969 = vweird.f32 %v1963
      %vm1970 = vmor %vm1968, %vm1969
      %v1971 = vsel %vm1970, %v1963, %v1967
      %v1972 = vand.u32 2147483647, %v1623
      %vm1973 = vcmp.eq.f32.partialorder %v1972, 8.507059e+37
      %v1974 = vand.u32 %v1623, 2147483648
      %v1975 = vor.u32 1.1754944e-38, %v1974
      %v1976 = vsel %vm1973, %v1975, %v1971
      %v1977 = vmul.f32 1.0, %v1976
      %v1978 = vrcp.pop %v1624
      %v1979 = vmul.f32 %v1624, %v1978
      %v1980 = vsub.f32 1.0, %v1979
      %v1981 = vmul.f32 %v1978, %v1980
      %v1982 = vadd.f32 %v1978, %v1981
      %vm1983 = vweird.f32 %v1624
      %vm1984 = vweird.f32 %v1978
      %vm1985 = vmor %vm1983, %vm1984
      %v1986 = vsel %vm1985, %v1978, %v1982
      %v1987 = vand.u32 2147483647, %v1624
      %vm1988 = vcmp.eq.f32.partialorder %v1987, 8.507059e+37
      %v1989 = vand.u32 %v1624, 2147483648
      %v1990 = vor.u32 1.1754944e-38, %v1989
      %v1991 = vsel %vm1988, %v1990, %v1986
      %v1992 = vmul.f32 1.0, %v1991
      %v1993 = vrcp.pop %v1625
      %v1994 = vmul.f32 %v1625, %v1993
      %v1995 = vsub.f32 1.0, %v1994
      %v1996 = vmul.f32 %v1993, %v1995
      %v1997 = vadd.f32 %v1993, %v1996
      %vm1998 = vweird.f32 %v1625
      %vm1999 = vweird.f32 %v1993
      %vm2000 = vmor %vm1998, %vm1999
      %v2001 = vsel %vm2000, %v1993, %v1997
      %v2002 = vand.u32 2147483647, %v1625
      %vm2003 = vcmp.eq.f32.partialorder %v2002, 8.507059e+37
      %v2004 = vand.u32 %v1625, 2147483648
      %v2005 = vor.u32 1.1754944e-38, %v2004
      %v2006 = vsel %vm2003, %v2005, %v2001
      %v2007 = vmul.f32 1.0, %v2006
      %v2008 = vrcp.pop %v1626
      %v2009 = vmul.f32 %v1626, %v2008
      %v2010 = vsub.f32 1.0, %v2009
      %v2011 = vmul.f32 %v2008, %v2010
      %v2012 = vadd.f32 %v2008, %v2011
      %vm2013 = vweird.f32 %v1626
      %vm2014 = vweird.f32 %v2008
      %vm2015 = vmor %vm2013, %vm2014
      %v2016 = vsel %vm2015, %v2008, %v2012
      %v2017 = vand.u32 2147483647, %v1626
      %vm2018 = vcmp.eq.f32.partialorder %v2017, 8.507059e+37
      %v2019 = vand.u32 %v1626, 2147483648
      %v2020 = vor.u32 1.1754944e-38, %v2019
      %v2021 = vsel %vm2018, %v2020, %v2016
      %v2022 = vmul.f32 1.0, %v2021
      %v2023 = vrcp.pop %v1627
      %v2024 = vmul.f32 %v1627, %v2023
      %v2025 = vsub.f32 1.0, %v2024
      %v2026 = vmul.f32 %v2023, %v2025
      %v2027 = vadd.f32 %v2023, %v2026
      %vm2028 = vweird.f32 %v1627
      %vm2029 = vweird.f32 %v2023
      %vm2030 = vmor %vm2028, %vm2029
      %v2031 = vsel %vm2030, %v2023, %v2027
      %v2032 = vand.u32 2147483647, %v1627
      %vm2033 = vcmp.eq.f32.partialorder %v2032, 8.507059e+37
      %v2034 = vand.u32 %v1627, 2147483648
      %v2035 = vor.u32 1.1754944e-38, %v2034
      %v2036 = vsel %vm2033, %v2035, %v2031
      %v2037 = vmul.f32 1.0, %v2036
      %v2038 = vrcp.pop %v1628
      %v2039 = vmul.f32 %v1628, %v2038
      %v2040 = vsub.f32 1.0, %v2039
      %v2041 = vmul.f32 %v2038, %v2040
      %v2042 = vadd.f32 %v2038, %v2041
      %vm2043 = vweird.f32 %v1628
      %vm2044 = vweird.f32 %v2038
      %vm2045 = vmor %vm2043, %vm2044
      %v2046 = vsel %vm2045, %v2038, %v2042
      %v2047 = vand.u32 2147483647, %v1628
      %vm2048 = vcmp.eq.f32.partialorder %v2047, 8.507059e+37
      %v2049 = vand.u32 %v1628, 2147483648
      %v2050 = vor.u32 1.1754944e-38, %v2049
      %v2051 = vsel %vm2048, %v2050, %v2046
      %v2052 = vmul.f32 1.0, %v2051
      %v2053 = vrcp.pop %v1629
      %v2054 = vmul.f32 %v1629, %v2053
      %v2055 = vsub.f32 1.0, %v2054
      %v2056 = vmul.f32 %v2053, %v2055
      %v2057 = vadd.f32 %v2053, %v2056
      %vm2058 = vweird.f32 %v1629
      %vm2059 = vweird.f32 %v2053
      %vm2060 = vmor %vm2058, %vm2059
      %v2061 = vsel %vm2060, %v2053, %v2057
      %v2062 = vand.u32 2147483647, %v1629
      %vm2063 = vcmp.eq.f32.partialorder %v2062, 8.507059e+37
      %v2064 = vand.u32 %v1629, 2147483648
      %v2065 = vor.u32 1.1754944e-38, %v2064
      %v2066 = vsel %vm2063, %v2065, %v2061
      %v2067 = vmul.f32 1.0, %v2066
      %v2068 = vrcp.pop %v1630
      %v2069 = vmul.f32 %v1630, %v2068
      %v2070 = vsub.f32 1.0, %v2069
      %v2071 = vmul.f32 %v2068, %v2070
      %v2072 = vadd.f32 %v2068, %v2071
      %vm2073 = vweird.f32 %v1630
      %vm2074 = vweird.f32 %v2068
      %vm2075 = vmor %vm2073, %vm2074
      %v2076 = vsel %vm2075, %v2068, %v2072
      %v2077 = vand.u32 2147483647, %v1630
      %vm2078 = vcmp.eq.f32.partialorder %v2077, 8.507059e+37
      %v2079 = vand.u32 %v1630, 2147483648
      %v2080 = vor.u32 1.1754944e-38, %v2079
      %v2081 = vsel %vm2078, %v2080, %v2076
      %v2082 = vmul.f32 1.0, %v2081
      %v2083 = vrcp.pop %v1631
      %v2084 = vmul.f32 %v1631, %v2083
      %v2085 = vsub.f32 1.0, %v2084
      %v2086 = vmul.f32 %v2083, %v2085
      %v2087 = vadd.f32 %v2083, %v2086
      %vm2088 = vweird.f32 %v1631
      %vm2089 = vweird.f32 %v2083
      %vm2090 = vmor %vm2088, %vm2089
      %v2091 = vsel %vm2090, %v2083, %v2087
      %v2092 = vand.u32 2147483647, %v1631
      %vm2093 = vcmp.eq.f32.partialorder %v2092, 8.507059e+37
      %v2094 = vand.u32 %v1631, 2147483648
      %v2095 = vor.u32 1.1754944e-38, %v2094
      %v2096 = vsel %vm2093, %v2095, %v2091
      %v2097 = vmul.f32 1.0, %v2096
      %v2098 = vrcp.pop %v1632
      %v2099 = vmul.f32 %v1632, %v2098
      %v2100 = vsub.f32 1.0, %v2099
      %v2101 = vmul.f32 %v2098, %v2100
      %v2102 = vadd.f32 %v2098, %v2101
      %vm2103 = vweird.f32 %v1632
      %vm2104 = vweird.f32 %v2098
      %vm2105 = vmor %vm2103, %vm2104
      %v2106 = vsel %vm2105, %v2098, %v2102
      %v2107 = vand.u32 2147483647, %v1632
      %vm2108 = vcmp.eq.f32.partialorder %v2107, 8.507059e+37
      %v2109 = vand.u32 %v1632, 2147483648
      %v2110 = vor.u32 1.1754944e-38, %v2109
      %v2111 = vsel %vm2108, %v2110, %v2106
      %v2112 = vmul.f32 1.0, %v2111
      %2114 = vset.pattern.permute.xlu0 0
      %2115 = vperm.xlu0 %2114, %v1647
      %v2116 = vpop.permute.xlu0 %2115
      %2119 = vset.pattern.permute.xlu0 0
      %2120 = vperm.xlu0 %2119, %v1662
      %v2121 = vpop.permute.xlu0 %2120
      %2124 = vset.pattern.permute.xlu0 0
      %2125 = vperm.xlu0 %2124, %v1677
      %v2126 = vpop.permute.xlu0 %2125
      %2129 = vset.pattern.permute.xlu0 0
      %2130 = vperm.xlu0 %2129, %v1692
      %v2131 = vpop.permute.xlu0 %2130
      %2134 = vset.pattern.permute.xlu0 0
      %2135 = vperm.xlu0 %2134, %v1707
      %v2136 = vpop.permute.xlu0 %2135
      %2139 = vset.pattern.permute.xlu0 0
      %2140 = vperm.xlu0 %2139, %v1722
      %v2141 = vpop.permute.xlu0 %2140
      %2144 = vset.pattern.permute.xlu0 0
      %2145 = vperm.xlu0 %2144, %v1737
      %v2146 = vpop.permute.xlu0 %2145
      %2149 = vset.pattern.permute.xlu0 0
      %2150 = vperm.xlu0 %2149, %v1752
      %v2151 = vpop.permute.xlu0 %2150
      %2154 = vset.pattern.permute.xlu0 0
      %2155 = vperm.xlu0 %2154, %v1767
      %v2156 = vpop.permute.xlu0 %2155
      %2159 = vset.pattern.permute.xlu0 0
      %2160 = vperm.xlu0 %2159, %v1782
      %v2161 = vpop.permute.xlu0 %2160
      %2164 = vset.pattern.permute.xlu0 0
      %2165 = vperm.xlu0 %2164, %v1797
      %v2166 = vpop.permute.xlu0 %2165
      %2169 = vset.pattern.permute.xlu0 0
      %2170 = vperm.xlu0 %2169, %v1812
      %v2171 = vpop.permute.xlu0 %2170
      %2174 = vset.pattern.permute.xlu0 0
      %2175 = vperm.xlu0 %2174, %v1827
      %v2176 = vpop.permute.xlu0 %2175
      %2179 = vset.pattern.permute.xlu0 0
      %2180 = vperm.xlu0 %2179, %v1842
      %v2181 = vpop.permute.xlu0 %2180
      %2184 = vset.pattern.permute.xlu0 0
      %2185 = vperm.xlu0 %2184, %v1857
      %v2186 = vpop.permute.xlu0 %2185
      %2189 = vset.pattern.permute.xlu0 0
      %2190 = vperm.xlu0 %2189, %v1872
      %v2191 = vpop.permute.xlu0 %2190
      %2194 = vset.pattern.permute.xlu0 0
      %2195 = vperm.xlu0 %2194, %v1887
      %v2196 = vpop.permute.xlu0 %2195
      %2199 = vset.pattern.permute.xlu0 0
      %2200 = vperm.xlu0 %2199, %v1902
      %v2201 = vpop.permute.xlu0 %2200
      %2204 = vset.pattern.permute.xlu0 0
      %2205 = vperm.xlu0 %2204, %v1917
      %v2206 = vpop.permute.xlu0 %2205
      %2209 = vset.pattern.permute.xlu0 0
      %2210 = vperm.xlu0 %2209, %v1932
      %v2211 = vpop.permute.xlu0 %2210
      %2214 = vset.pattern.permute.xlu0 0
      %2215 = vperm.xlu0 %2214, %v1947
      %v2216 = vpop.permute.xlu0 %2215
      %2219 = vset.pattern.permute.xlu0 0
      %2220 = vperm.xlu0 %2219, %v1962
      %v2221 = vpop.permute.xlu0 %2220
      %2224 = vset.pattern.permute.xlu0 0
      %2225 = vperm.xlu0 %2224, %v1977
      %v2226 = vpop.permute.xlu0 %2225
      %2229 = vset.pattern.permute.xlu0 0
      %2230 = vperm.xlu0 %2229, %v1992
      %v2231 = vpop.permute.xlu0 %2230
      %2234 = vset.pattern.permute.xlu0 0
      %2235 = vperm.xlu0 %2234, %v2007
      %v2236 = vpop.permute.xlu0 %2235
      %2239 = vset.pattern.permute.xlu0 0
      %2240 = vperm.xlu0 %2239, %v2022
      %v2241 = vpop.permute.xlu0 %2240
      %2244 = vset.pattern.permute.xlu0 0
      %2245 = vperm.xlu0 %2244, %v2037
      %v2246 = vpop.permute.xlu0 %2245
      %2249 = vset.pattern.permute.xlu0 0
      %2250 = vperm.xlu0 %2249, %v2052
      %v2251 = vpop.permute.xlu0 %2250
      %2254 = vset.pattern.permute.xlu0 0
      %2255 = vperm.xlu0 %2254, %v2067
      %v2256 = vpop.permute.xlu0 %2255
      %2259 = vset.pattern.permute.xlu0 0
      %2260 = vperm.xlu0 %2259, %v2082
      %v2261 = vpop.permute.xlu0 %2260
      %2264 = vset.pattern.permute.xlu0 0
      %2265 = vperm.xlu0 %2264, %v2097
      %v2266 = vpop.permute.xlu0 %2265
      %2269 = vset.pattern.permute.xlu0 0
      %2270 = vperm.xlu0 %2269, %v2112
      %v2271 = vpop.permute.xlu0 %2270
      %v2273 = vmul.f32 %v519, %v2116
      %v2274 = vmul.f32 %v522, %v2121
      %v2275 = vmul.f32 %v525, %v2126
      %v2276 = vmul.f32 %v528, %v2131
      %v2277 = vmul.f32 %v531, %v2136
      %v2278 = vmul.f32 %v534, %v2141
      %v2279 = vmul.f32 %v537, %v2146
      %v2280 = vmul.f32 %v540, %v2151
      %v2281 = vmul.f32 %v543, %v2156
      %v2282 = vmul.f32 %v546, %v2161
      %v2283 = vmul.f32 %v549, %v2166
      %v2284 = vmul.f32 %v552, %v2171
      %v2285 = vmul.f32 %v555, %v2176
      %v2286 = vmul.f32 %v558, %v2181
      %v2287 = vmul.f32 %v561, %v2186
      %v2288 = vmul.f32 %v564, %v2191
      %v2289 = vmul.f32 %v567, %v2196
      %v2290 = vmul.f32 %v570, %v2201
      %v2291 = vmul.f32 %v573, %v2206
      %v2292 = vmul.f32 %v576, %v2211
      %v2293 = vmul.f32 %v579, %v2216
      %v2294 = vmul.f32 %v582, %v2221
      %v2295 = vmul.f32 %v585, %v2226
      %v2296 = vmul.f32 %v588, %v2231
      %v2297 = vmul.f32 %v591, %v2236
      %v2298 = vmul.f32 %v594, %v2241
      %v2299 = vmul.f32 %v597, %v2246
      %v2300 = vmul.f32 %v600, %v2251
      %v2301 = vmul.f32 %v603, %v2256
      %v2302 = vmul.f32 %v606, %v2261
      %v2303 = vmul.f32 %v609, %v2266
      %v2304 = vmul.f32 %v612, %v2271
      %v2305 = vld [vmem:[%s4] sm:$0xff]
      %v2306 = vld [vmem:[%s4 + $0x8] sm:$0xff]
      %v2307 = vld [vmem:[%s4 + $0x10] sm:$0xff]
      %v2308 = vld [vmem:[%s4 + $0x18] sm:$0xff]
      %v2310 = vsel %vm618, %v2273, 0
      %v2313 = vsel %vm618, %v2274, 0
      %v2316 = vsel %vm618, %v2275, 0
      %v2319 = vsel %vm618, %v2276, 0
      %v2322 = vsel %vm618, %v2277, 0
      %v2325 = vsel %vm618, %v2278, 0
      %v2328 = vsel %vm618, %v2279, 0
      %v2331 = vsel %vm618, %v2280, 0
      %v2334 = vsel %vm618, %v2281, 0
      %v2337 = vsel %vm618, %v2282, 0
      %v2340 = vsel %vm618, %v2283, 0
      %v2343 = vsel %vm618, %v2284, 0
      %v2346 = vsel %vm618, %v2285, 0
      %v2349 = vsel %vm618, %v2286, 0
      %v2352 = vsel %vm618, %v2287, 0
      %v2355 = vsel %vm618, %v2288, 0
      %v2358 = vsel %vm618, %v2289, 0
      %v2361 = vsel %vm618, %v2290, 0
      %v2364 = vsel %vm618, %v2291, 0
      %v2367 = vsel %vm618, %v2292, 0
      %v2370 = vsel %vm618, %v2293, 0
      %v2373 = vsel %vm618, %v2294, 0
      %v2376 = vsel %vm618, %v2295, 0
      %v2379 = vsel %vm618, %v2296, 0
      %v2382 = vsel %vm618, %v2297, 0
      %v2385 = vsel %vm618, %v2298, 0
      %v2388 = vsel %vm618, %v2299, 0
      %v2391 = vsel %vm618, %v2300, 0
      %v2394 = vsel %vm618, %v2301, 0
      %v2397 = vsel %vm618, %v2302, 0
      %v2400 = vsel %vm618, %v2303, 0
      %v2403 = vsel %vm618, %v2304, 0
      %2405 = vmatpush.msra.mxu0 0.0
      %2406 = vmatpush.msra.mxu0 0.0
      %2407 = vmatpush.msra.mxu0 0.0
      %2408 = vmatpush.msra.mxu0 0.0
      %2409 = vmatpush.msra.mxu0 0.0
      %2410 = vmatpush.msra.mxu0 0.0
      %2411 = vmatpush.msra.mxu0 0.0
      %2412 = vmatpush.msra.mxu0 0.0
      %2413 = vmatpush.msra.mxu0 0.0
      %2414 = vmatpush.msra.mxu0 0.0
      %2415 = vmatpush.msra.mxu0 0.0
      %2416 = vmatpush.msra.mxu0 0.0
      %2417 = vmatpush.msra.mxu0 %v2308
      %2418 = vmatpush.msra.mxu0 %v2307
      %2419 = vmatpush.msra.mxu0 %v2306
      %2420 = vmatpush.msra.mxu0 %v2305
      %2421 = vmatmul.f32.gmra.mxu0 %v2310
      %v2422 = vpop.f32.mrf.mxu0
      %v2423 = vadd.f32 0.0, %v2422
      %2424 = vmatmul.f32.gmra.mxu0 %v2313
      %v2425 = vpop.f32.mrf.mxu0
      %v2426 = vadd.f32 0.0, %v2425
      %2427 = vmatmul.f32.gmra.mxu0 %v2316
      %v2428 = vpop.f32.mrf.mxu0
      %v2429 = vadd.f32 0.0, %v2428
      %2430 = vmatmul.f32.gmra.mxu0 %v2319
      %v2431 = vpop.f32.mrf.mxu0
      %v2432 = vadd.f32 0.0, %v2431
      %2433 = vmatmul.f32.gmra.mxu0 %v2322
      %v2434 = vpop.f32.mrf.mxu0
      %v2435 = vadd.f32 0.0, %v2434
      %2436 = vmatmul.f32.gmra.mxu0 %v2325
      %v2437 = vpop.f32.mrf.mxu0
      %v2438 = vadd.f32 0.0, %v2437
      %2439 = vmatmul.f32.gmra.mxu0 %v2328
      %v2440 = vpop.f32.mrf.mxu0
      %v2441 = vadd.f32 0.0, %v2440
      %2442 = vmatmul.f32.gmra.mxu0 %v2331
      %v2443 = vpop.f32.mrf.mxu0
      %v2444 = vadd.f32 0.0, %v2443
      %2445 = vmatmul.f32.gmra.mxu0 %v2334
      %v2446 = vpop.f32.mrf.mxu0
      %v2447 = vadd.f32 0.0, %v2446
      %2448 = vmatmul.f32.gmra.mxu0 %v2337
      %v2449 = vpop.f32.mrf.mxu0
      %v2450 = vadd.f32 0.0, %v2449
      %2451 = vmatmul.f32.gmra.mxu0 %v2340
      %v2452 = vpop.f32.mrf.mxu0
      %v2453 = vadd.f32 0.0, %v2452
      %2454 = vmatmul.f32.gmra.mxu0 %v2343
      %v2455 = vpop.f32.mrf.mxu0
      %v2456 = vadd.f32 0.0, %v2455
      %2457 = vmatmul.f32.gmra.mxu0 %v2346
      %v2458 = vpop.f32.mrf.mxu0
      %v2459 = vadd.f32 0.0, %v2458
      %2460 = vmatmul.f32.gmra.mxu0 %v2349
      %v2461 = vpop.f32.mrf.mxu0
      %v2462 = vadd.f32 0.0, %v2461
      %2463 = vmatmul.f32.gmra.mxu0 %v2352
      %v2464 = vpop.f32.mrf.mxu0
      %v2465 = vadd.f32 0.0, %v2464
      %2466 = vmatmul.f32.gmra.mxu0 %v2355
      %v2467 = vpop.f32.mrf.mxu0
      %v2468 = vadd.f32 0.0, %v2467
      %2469 = vmatmul.f32.gmra.mxu0 %v2358
      %v2470 = vpop.f32.mrf.mxu0
      %v2471 = vadd.f32 0.0, %v2470
      %2472 = vmatmul.f32.gmra.mxu0 %v2361
      %v2473 = vpop.f32.mrf.mxu0
      %v2474 = vadd.f32 0.0, %v2473
      %2475 = vmatmul.f32.gmra.mxu0 %v2364
      %v2476 = vpop.f32.mrf.mxu0
      %v2477 = vadd.f32 0.0, %v2476
      %2478 = vmatmul.f32.gmra.mxu0 %v2367
      %v2479 = vpop.f32.mrf.mxu0
      %v2480 = vadd.f32 0.0, %v2479
      %2481 = vmatmul.f32.gmra.mxu0 %v2370
      %v2482 = vpop.f32.mrf.mxu0
      %v2483 = vadd.f32 0.0, %v2482
      %2484 = vmatmul.f32.gmra.mxu0 %v2373
      %v2485 = vpop.f32.mrf.mxu0
      %v2486 = vadd.f32 0.0, %v2485
      %2487 = vmatmul.f32.gmra.mxu0 %v2376
      %v2488 = vpop.f32.mrf.mxu0
      %v2489 = vadd.f32 0.0, %v2488
      %2490 = vmatmul.f32.gmra.mxu0 %v2379
      %v2491 = vpop.f32.mrf.mxu0
      %v2492 = vadd.f32 0.0, %v2491
      %2493 = vmatmul.f32.gmra.mxu0 %v2382
      %v2494 = vpop.f32.mrf.mxu0
      %v2495 = vadd.f32 0.0, %v2494
      %2496 = vmatmul.f32.gmra.mxu0 %v2385
      %v2497 = vpop.f32.mrf.mxu0
      %v2498 = vadd.f32 0.0, %v2497
      %2499 = vmatmul.f32.gmra.mxu0 %v2388
      %v2500 = vpop.f32.mrf.mxu0
      %v2501 = vadd.f32 0.0, %v2500
      %2502 = vmatmul.f32.gmra.mxu0 %v2391
      %v2503 = vpop.f32.mrf.mxu0
      %v2504 = vadd.f32 0.0, %v2503
      %2505 = vmatmul.f32.gmra.mxu0 %v2394
      %v2506 = vpop.f32.mrf.mxu0
      %v2507 = vadd.f32 0.0, %v2506
      %2508 = vmatmul.f32.gmra.mxu0 %v2397
      %v2509 = vpop.f32.mrf.mxu0
      %v2510 = vadd.f32 0.0, %v2509
      %2511 = vmatmul.f32.gmra.mxu0 %v2400
      %v2512 = vpop.f32.mrf.mxu0
      %v2513 = vadd.f32 0.0, %v2512
      %2514 = vmatmul.f32.gmra.mxu0 %v2403
      %v2515 = vpop.f32.mrf.mxu0
      %v2516 = vadd.f32 0.0, %v2515
      %2517 = vdwg.mxu0
      %v2518 = vld [vmem:[%s5] sm:$0x1]
      %v2520 = vperm.slane %v2518, 0
      %v2522 = vadd.f32 %v2423, %v2520
      %v2523 = vadd.f32 %v2426, %v2520
      %v2524 = vadd.f32 %v2429, %v2520
      %v2525 = vadd.f32 %v2432, %v2520
      %v2526 = vadd.f32 %v2435, %v2520
      %v2527 = vadd.f32 %v2438, %v2520
      %v2528 = vadd.f32 %v2441, %v2520
      %v2529 = vadd.f32 %v2444, %v2520
      %v2530 = vadd.f32 %v2447, %v2520
      %v2531 = vadd.f32 %v2450, %v2520
      %v2532 = vadd.f32 %v2453, %v2520
      %v2533 = vadd.f32 %v2456, %v2520
      %v2534 = vadd.f32 %v2459, %v2520
      %v2535 = vadd.f32 %v2462, %v2520
      %v2536 = vadd.f32 %v2465, %v2520
      %v2537 = vadd.f32 %v2468, %v2520
      %v2538 = vadd.f32 %v2471, %v2520
      %v2539 = vadd.f32 %v2474, %v2520
      %v2540 = vadd.f32 %v2477, %v2520
      %v2541 = vadd.f32 %v2480, %v2520
      %v2542 = vadd.f32 %v2483, %v2520
      %v2543 = vadd.f32 %v2486, %v2520
      %v2544 = vadd.f32 %v2489, %v2520
      %v2545 = vadd.f32 %v2492, %v2520
      %v2546 = vadd.f32 %v2495, %v2520
      %v2547 = vadd.f32 %v2498, %v2520
      %v2548 = vadd.f32 %v2501, %v2520
      %v2549 = vadd.f32 %v2504, %v2520
      %v2550 = vadd.f32 %v2507, %v2520
      %v2551 = vadd.f32 %v2510, %v2520
      %v2552 = vadd.f32 %v2513, %v2520
      %v2553 = vadd.f32 %v2516, %v2520
      %v2554 = vtanh.pop %v2522
      %v2555 = vtanh.pop %v2523
      %v2556 = vtanh.pop %v2524
      %v2557 = vtanh.pop %v2525
      %v2558 = vtanh.pop %v2526
      %v2559 = vtanh.pop %v2527
      %v2560 = vtanh.pop %v2528
      %v2561 = vtanh.pop %v2529
      %v2562 = vtanh.pop %v2530
      %v2563 = vtanh.pop %v2531
      %v2564 = vtanh.pop %v2532
      %v2565 = vtanh.pop %v2533
      %v2566 = vtanh.pop %v2534
      %v2567 = vtanh.pop %v2535
      %v2568 = vtanh.pop %v2536
      %v2569 = vtanh.pop %v2537
      %v2570 = vtanh.pop %v2538
      %v2571 = vtanh.pop %v2539
      %v2572 = vtanh.pop %v2540
      %v2573 = vtanh.pop %v2541
      %v2574 = vtanh.pop %v2542
      %v2575 = vtanh.pop %v2543
      %v2576 = vtanh.pop %v2544
      %v2577 = vtanh.pop %v2545
      %v2578 = vtanh.pop %v2546
      %v2579 = vtanh.pop %v2547
      %v2580 = vtanh.pop %v2548
      %v2581 = vtanh.pop %v2549
      %v2582 = vtanh.pop %v2550
      %v2583 = vtanh.pop %v2551
      %v2584 = vtanh.pop %v2552
      %v2585 = vtanh.pop %v2553
      %vm2586 = vcmask 64512
      %v2587 = vsel %vm2586, %v2554, -inf
      %v2588 = vsel %vm2586, %v2555, -inf
      %v2589 = vmax.f32 %v2587, %v2588
      %v2590 = vrot.slane %v2589, 4
      %v2591 = vmax.f32 %v2589, %v2590
      %v2592 = vrot.slane %v2591, 2
      %v2593 = vmax.f32 %v2591, %v2592
      %v2594 = vrot.slane %v2593, 1
      %v2595 = vmax.f32 %v2593, %v2594
      %v2596 = vsel %vm2586, %v2556, -inf
      %v2597 = vsel %vm2586, %v2557, -inf
      %v2598 = vmax.f32 %v2596, %v2597
      %v2599 = vrot.slane %v2598, 4
      %v2600 = vmax.f32 %v2598, %v2599
      %v2601 = vrot.slane %v2600, 2
      %v2602 = vmax.f32 %v2600, %v2601
      %v2603 = vrot.slane %v2602, 1
      %v2604 = vmax.f32 %v2602, %v2603
      %v2605 = vsel %vm2586, %v2558, -inf
      %v2606 = vsel %vm2586, %v2559, -inf
      %v2607 = vmax.f32 %v2605, %v2606
      %v2608 = vrot.slane %v2607, 4
      %v2609 = vmax.f32 %v2607, %v2608
      %v2610 = vrot.slane %v2609, 2
      %v2611 = vmax.f32 %v2609, %v2610
      %v2612 = vrot.slane %v2611, 1
      %v2613 = vmax.f32 %v2611, %v2612
      %v2614 = vsel %vm2586, %v2560, -inf
      %v2615 = vsel %vm2586, %v2561, -inf
      %v2616 = vmax.f32 %v2614, %v2615
      %v2617 = vrot.slane %v2616, 4
      %v2618 = vmax.f32 %v2616, %v2617
      %v2619 = vrot.slane %v2618, 2
      %v2620 = vmax.f32 %v2618, %v2619
      %v2621 = vrot.slane %v2620, 1
      %v2622 = vmax.f32 %v2620, %v2621
      %v2623 = vsel %vm2586, %v2562, -inf
      %v2624 = vsel %vm2586, %v2563, -inf
      %v2625 = vmax.f32 %v2623, %v2624
      %v2626 = vrot.slane %v2625, 4
      %v2627 = vmax.f32 %v2625, %v2626
      %v2628 = vrot.slane %v2627, 2
      %v2629 = vmax.f32 %v2627, %v2628
      %v2630 = vrot.slane %v2629, 1
      %v2631 = vmax.f32 %v2629, %v2630
      %v2632 = vsel %vm2586, %v2564, -inf
      %v2633 = vsel %vm2586, %v2565, -inf
      %v2634 = vmax.f32 %v2632, %v2633
      %v2635 = vrot.slane %v2634, 4
      %v2636 = vmax.f32 %v2634, %v2635
      %v2637 = vrot.slane %v2636, 2
      %v2638 = vmax.f32 %v2636, %v2637
      %v2639 = vrot.slane %v2638, 1
      %v2640 = vmax.f32 %v2638, %v2639
      %v2641 = vsel %vm2586, %v2566, -inf
      %v2642 = vsel %vm2586, %v2567, -inf
      %v2643 = vmax.f32 %v2641, %v2642
      %v2644 = vrot.slane %v2643, 4
      %v2645 = vmax.f32 %v2643, %v2644
      %v2646 = vrot.slane %v2645, 2
      %v2647 = vmax.f32 %v2645, %v2646
      %v2648 = vrot.slane %v2647, 1
      %v2649 = vmax.f32 %v2647, %v2648
      %v2650 = vsel %vm2586, %v2568, -inf
      %v2651 = vsel %vm2586, %v2569, -inf
      %v2652 = vmax.f32 %v2650, %v2651
      %v2653 = vrot.slane %v2652, 4
      %v2654 = vmax.f32 %v2652, %v2653
      %v2655 = vrot.slane %v2654, 2
      %v2656 = vmax.f32 %v2654, %v2655
      %v2657 = vrot.slane %v2656, 1
      %v2658 = vmax.f32 %v2656, %v2657
      %v2659 = vsel %vm2586, %v2570, -inf
      %v2660 = vsel %vm2586, %v2571, -inf
      %v2661 = vmax.f32 %v2659, %v2660
      %v2662 = vrot.slane %v2661, 4
      %v2663 = vmax.f32 %v2661, %v2662
      %v2664 = vrot.slane %v2663, 2
      %v2665 = vmax.f32 %v2663, %v2664
      %v2666 = vrot.slane %v2665, 1
      %v2667 = vmax.f32 %v2665, %v2666
      %v2668 = vsel %vm2586, %v2572, -inf
      %v2669 = vsel %vm2586, %v2573, -inf
      %v2670 = vmax.f32 %v2668, %v2669
      %v2671 = vrot.slane %v2670, 4
      %v2672 = vmax.f32 %v2670, %v2671
      %v2673 = vrot.slane %v2672, 2
      %v2674 = vmax.f32 %v2672, %v2673
      %v2675 = vrot.slane %v2674, 1
      %v2676 = vmax.f32 %v2674, %v2675
      %v2677 = vsel %vm2586, %v2574, -inf
      %v2678 = vsel %vm2586, %v2575, -inf
      %v2679 = vmax.f32 %v2677, %v2678
      %v2680 = vrot.slane %v2679, 4
      %v2681 = vmax.f32 %v2679, %v2680
      %v2682 = vrot.slane %v2681, 2
      %v2683 = vmax.f32 %v2681, %v2682
      %v2684 = vrot.slane %v2683, 1
      %v2685 = vmax.f32 %v2683, %v2684
      %v2686 = vsel %vm2586, %v2576, -inf
      %v2687 = vsel %vm2586, %v2577, -inf
      %v2688 = vmax.f32 %v2686, %v2687
      %v2689 = vrot.slane %v2688, 4
      %v2690 = vmax.f32 %v2688, %v2689
      %v2691 = vrot.slane %v2690, 2
      %v2692 = vmax.f32 %v2690, %v2691
      %v2693 = vrot.slane %v2692, 1
      %v2694 = vmax.f32 %v2692, %v2693
      %v2695 = vsel %vm2586, %v2578, -inf
      %v2696 = vsel %vm2586, %v2579, -inf
      %v2697 = vmax.f32 %v2695, %v2696
      %v2698 = vrot.slane %v2697, 4
      %v2699 = vmax.f32 %v2697, %v2698
      %v2700 = vrot.slane %v2699, 2
      %v2701 = vmax.f32 %v2699, %v2700
      %v2702 = vrot.slane %v2701, 1
      %v2703 = vmax.f32 %v2701, %v2702
      %v2704 = vsel %vm2586, %v2580, -inf
      %v2705 = vsel %vm2586, %v2581, -inf
      %v2706 = vmax.f32 %v2704, %v2705
      %v2707 = vrot.slane %v2706, 4
      %v2708 = vmax.f32 %v2706, %v2707
      %v2709 = vrot.slane %v2708, 2
      %v2710 = vmax.f32 %v2708, %v2709
      %v2711 = vrot.slane %v2710, 1
      %v2712 = vmax.f32 %v2710, %v2711
      %v2713 = vsel %vm2586, %v2582, -inf
      %v2714 = vsel %vm2586, %v2583, -inf
      %v2715 = vmax.f32 %v2713, %v2714
      %v2716 = vrot.slane %v2715, 4
      %v2717 = vmax.f32 %v2715, %v2716
      %v2718 = vrot.slane %v2717, 2
      %v2719 = vmax.f32 %v2717, %v2718
      %v2720 = vrot.slane %v2719, 1
      %v2721 = vmax.f32 %v2719, %v2720
      %v2722 = vsel %vm2586, %v2584, -inf
      %v2723 = vsel %vm2586, %v2585, -inf
      %v2724 = vmax.f32 %v2722, %v2723
      %v2725 = vrot.slane %v2724, 4
      %v2726 = vmax.f32 %v2724, %v2725
      %v2727 = vrot.slane %v2726, 2
      %v2728 = vmax.f32 %v2726, %v2727
      %v2729 = vrot.slane %v2728, 1
      %v2730 = vmax.f32 %v2728, %v2729
      %vm2747 = vcmask 1041409
      %v2748 = vsel %vm2747, %v2604, %v2595
      %vm2749 = vcmask 1042434
      %v2750 = vsel %vm2749, %v2613, %v2748
      %vm2751 = vcmask 1043459
      %v2752 = vsel %vm2751, %v2622, %v2750
      %vm2753 = vcmask 1044484
      %v2754 = vsel %vm2753, %v2631, %v2752
      %vm2755 = vcmask 1045509
      %v2756 = vsel %vm2755, %v2640, %v2754
      %vm2757 = vcmask 1046534
      %v2758 = vsel %vm2757, %v2649, %v2756
      %vm2759 = vcmask 1047559
      %v2760 = vsel %vm2759, %v2658, %v2758
      %v2761 = vsel %vm2747, %v2676, %v2667
      %v2762 = vsel %vm2749, %v2685, %v2761
      %v2763 = vsel %vm2751, %v2694, %v2762
      %v2764 = vsel %vm2753, %v2703, %v2763
      %v2765 = vsel %vm2755, %v2712, %v2764
      %v2766 = vsel %vm2757, %v2721, %v2765
      %v2767 = vsel %vm2759, %v2730, %v2766
      %2770 = vst.msk [vmem:[%s257] sm:$0xff] %vm2586, %v2760
      %2771 = vst.msk [vmem:[%s257 + $0x8] sm:$0xff] %vm2586, %v2767
      %s2772 = smul.u32 2, %s18
      %p2773 = scmp.lt.s32.totalorder %s2772, 3
      %s2774 = scalar_select %p2773, %s2772, 3
      %s2775 = smul.addr %s2774, 8
      %s2776 = scalar_lea.vmem %s6, %s2775
      // Predicated region
      $region45: #{tpu_custom_call.1} parent=43 // pred_check
        %p2777 = pneg %p167
      $region46: #{tpu_custom_call.1} parent=43 // pred_check_branch
        %2779 = sbr.rel (%p2777) target = $region48
      $region47: #{tpu_custom_call.1} parent=43 // pred_region
        %s2780 = smul.u32 2, %s18
      $region48: #{tpu_custom_call.1} parent=43 // pred_fallthru
        _
    $region44: #{tpu_custom_call.1} parent=5 // pred_fallthru
      _
    %p2781 = scmp.le.s32.totalorder 2, %s13
    // Predicated region
    $region49: #{tpu_custom_call.1} parent=5 // pred_check
      %p2782 = pneg %p2781
    $region50: #{tpu_custom_call.1} parent=5 // pred_check_branch
      %2784 = sbr.rel (%p2782) target = $region52
    $region51: #{tpu_custom_call.1} parent=5 // pred_region
      %s2785 = ssub.s32 %s13, 2
      // Predicated region
      $region53: #{tpu_custom_call.1} parent=51 // pred_check
        %p2786 = pneg %p173
      $region54: #{tpu_custom_call.1} parent=51 // pred_check_branch
        %2788 = sbr.rel (%p2786) target = $region56
      $region55: #{tpu_custom_call.1} parent=51 // pred_region
        %s2789 = smul.u32 2, %s19
        %p2790 = scmp.lt.s32.totalorder %s2789, 3
        %s2791 = scalar_select %p2790, %s2789, 3
        %s2792 = smul.addr %s2791, 8
        %s2793 = scalar_lea.vmem %s6, %s2792
      $region56: #{tpu_custom_call.1} parent=51 // pred_fallthru
        _
    $region52: #{tpu_custom_call.1} parent=5 // pred_fallthru
      _
  $region6: #{tpu_custom_call.1} parent=0 // loop_footer
    %s17 = sadd.s32 1, %s13
  $region7: #{tpu_custom_call.1} parent=0 // loop_footer_branch
    %12 = sbr.rel target = $region3
  $region8: #{tpu_custom_call.1} parent=0 // loop_exit
    _

</llo_original>
